<compile_context>
chip_gen: v5e
topology: v5e:2x2
jax: 0.10.0
libtpu: 0.0.40
codegen_flags: <defaults>
</compile_context>

<pallas_src>
import functools
import math

import jax
import jax.numpy as jnp
from jax.experimental import pallas as pl
from jax.experimental.pallas import tpu as pltpu


# ----------------------------------------------------------------------------
# Per-generation budgets & feature probing
# ----------------------------------------------------------------------------

def _vmem_limit_bytes():
    """~75% of physical VMEM: ~48 MiB on v7x (64 MiB/TC), ~96 MiB on v5e/v6e."""
    try:
        cap = pltpu.get_tpu_info().vmem_capacity_bytes
        return int(min((cap * 3) // 4, 100 * 1024 * 1024))
    except Exception:
        return 48 * 1024 * 1024          # safe on every generation


_VMEM_LIMIT = _vmem_limit_bytes()


def _cp(dimension_semantics):
    return pltpu.CompilerParams(dimension_semantics=dimension_semantics,
                                vmem_limit_bytes=_VMEM_LIMIT)


def _probe_copy_kernel(x_ref, o_ref):
    o_ref[...] = x_ref[...]


def _probe_single_buffering():
    """Check that pipeline_mode=pl.Buffered(1) lowers on this jax/Mosaic version."""
    if not hasattr(pl, "Buffered"):
        return False
    try:
        out = pl.pallas_call(
            _probe_copy_kernel,
            out_shape=jax.ShapeDtypeStruct((8, 128), jnp.float32),
            grid=(2,),
            in_specs=[pl.BlockSpec((8, 128), lambda i: (0, 0),
                                   pipeline_mode=pl.Buffered(1))],
            out_specs=pl.BlockSpec((8, 128), lambda i: (0, 0)),
        )(jnp.zeros((8, 128), jnp.float32))
        jax.block_until_ready(out)
        return True
    except Exception:
        return False


_SINGLE_BUFFER_OK = _probe_single_buffering()


def _const_spec(block_shape, index_map):
    """Grid-invariant operand (weights/bias/LN params): no double-buffering."""
    if _SINGLE_BUFFER_OK:
        return pl.BlockSpec(block_shape, index_map, pipeline_mode=pl.Buffered(1))
    return pl.BlockSpec(block_shape, index_map)


def _pick_tm(M):
    """Largest row tile (<=512, multiple of 8) that divides M, else full M."""
    for tm in (512, 256, 128, 64, 32, 16, 8):
        if M % tm == 0:
            return tm
    return M


def _pick_tn(N, max_tn=512):
    """Column tile for large-N linears (bounds VMEM at BERT-scale inter dims)."""
    if N <= max_tn:
        return N
    for tn in (512, 256, 128):
        if N % tn == 0:
            return tn
    return N


# ----------------------------------------------------------------------------
# Pallas kernels
# ----------------------------------------------------------------------------

def _linear_kernel(x_ref, w_ref, b_ref, o_ref, *, activation):
    y = jnp.dot(x_ref[...], w_ref[...], preferred_element_type=jnp.float32)
    y = y + b_ref[...]                                       # f32 epilogue
    if activation == "gelu":
        c = math.sqrt(2.0 / math.pi)
        y = 0.5 * y * (1.0 + jnp.tanh(c * (y + 0.044715 * y * y * y)))
    o_ref[...] = y.astype(o_ref.dtype)                       # cast only at store


def _linear_res_ln_kernel(x_ref, w_ref, b_ref, r_ref, g_ref, bb_ref, o_ref, *, eps):
    # matmul + bias + residual add + LayerNorm, all in one epilogue (f32 math)
    y = jnp.dot(x_ref[...], w_ref[...], preferred_element_type=jnp.float32)
    y = y + b_ref[...] + r_ref[...].astype(jnp.float32)
    mu = jnp.mean(y, axis=-1, keepdims=True)
    d = y - mu
    var = jnp.mean(d * d, axis=-1, keepdims=True)
    o_ref[...] = (d * jax.lax.rsqrt(var + eps) * g_ref[...] + bb_ref[...]).astype(
        o_ref.dtype)


def _layernorm_kernel(x_ref, g_ref, b_ref, o_ref, *, eps):
    x = x_ref[...].astype(jnp.float32)
    mu = jnp.mean(x, axis=-1, keepdims=True)
    d = x - mu
    var = jnp.mean(d * d, axis=-1, keepdims=True)
    o_ref[...] = (d * jax.lax.rsqrt(var + eps) * g_ref[...] + b_ref[...]).astype(
        o_ref.dtype)


def _attn_block_kernel(x_ref, wqkv_ref, bqkv_ref, o_ref, *, n_heads, scale):
    """Fused QKV projection + multi-head self-attention for one batch element.

    x_ref: (S, H) bf16, wqkv_ref: (H, 3H) bf16, bqkv_ref: (1, 3H) f32,
    o_ref: (S, H) bf16 written lane-dense (all heads concatenated).
    """
    H = x_ref.shape[1]
    Dh = H // n_heads
    qkv = jnp.dot(x_ref[...], wqkv_ref[...],
                  preferred_element_type=jnp.float32) + bqkv_ref[...]   # (S, 3H) f32

    ctx = []
    for h in range(n_heads):                       # static unroll; one SxS live at a time
        q = (qkv[:, h * Dh:(h + 1) * Dh] * scale).astype(jnp.bfloat16)  # scale folded in
        k = qkv[:, H + h * Dh:H + (h + 1) * Dh].astype(jnp.bfloat16)
        v = qkv[:, 2 * H + h * Dh:2 * H + (h + 1) * Dh].astype(jnp.bfloat16)
        s = jax.lax.dot_general(q, k, (((1,), (1,)), ((), ())),         # no explicit k.T
                                preferred_element_type=jnp.float32)     # (S, S)
        s = s - jnp.max(s, axis=-1, keepdims=True)
        p = jnp.exp(s)
        p = p * pl.reciprocal(jnp.sum(p, axis=-1, keepdims=True), approx=True)
        ctx.append(jnp.dot(p.astype(jnp.bfloat16), v,
                           preferred_element_type=jnp.float32))         # (S, Dh)
    o_ref[...] = jnp.concatenate(ctx, axis=-1).astype(o_ref.dtype)      # lane-dense (S, H)


# ----------------------------------------------------------------------------
# Pallas wrappers (row-tiled, weights resident across row tiles)
# ----------------------------------------------------------------------------

def pallas_linear(x, w, b, activation=None, out_dtype=jnp.bfloat16):
    M, K = x.shape
    N = w.shape[1]
    tm = _pick_tm(M)
    tn = _pick_tn(N)
    kern = functools.partial(_linear_kernel, activation=activation)
    return pl.pallas_call(
        kern,
        out_shape=jax.ShapeDtypeStruct((M, N), out_dtype),
        grid=(M // tm, N // tn),
        in_specs=[
            pl.BlockSpec((tm, K), lambda i, j: (i, 0)),
            pl.BlockSpec((K, tn), lambda i, j: (0, j)),
            pl.BlockSpec((1, tn), lambda i, j: (0, j)),
        ],
        out_specs=pl.BlockSpec((tm, tn), lambda i, j: (i, j)),
        compiler_params=_cp(("parallel", "parallel")),
    )(x, w, b.reshape(1, N))


def pallas_linear_res_ln(x, w, b, residual, gamma, beta, eps=1e-12):
    """y = LayerNorm(x @ w + b + residual); full-N columns (LN needs the row)."""
    M, K = x.shape
    N = w.shape[1]
    tm = _pick_tm(M)
    kern = functools.partial(_linear_res_ln_kernel, eps=eps)
    return pl.pallas_call(
        kern,
        out_shape=jax.ShapeDtypeStruct((M, N), jnp.bfloat16),
        grid=(M // tm,),
        in_specs=[
            pl.BlockSpec((tm, K), lambda i: (i, 0)),
            _const_spec((K, N), lambda i: (0, 0)),     # weight resident, single-buffered
            _const_spec((1, N), lambda i: (0, 0)),
            pl.BlockSpec((tm, N), lambda i: (i, 0)),   # residual row tile
            _const_spec((1, N), lambda i: (0, 0)),
            _const_spec((1, N), lambda i: (0, 0)),
        ],
        out_specs=pl.BlockSpec((tm, N), lambda i: (i, 0)),
        compiler_params=_cp(("parallel",)),
    )(x, w, b.reshape(1, N), residual, gamma.reshape(1, N), beta.reshape(1, N))


def pallas_layernorm(x, g, b, eps=1e-12):
    M, H = x.shape
    tm = _pick_tm(M)
    kern = functools.partial(_layernorm_kernel, eps=eps)
    return pl.pallas_call(
        kern,
        out_shape=jax.ShapeDtypeStruct((M, H), jnp.bfloat16),
        grid=(M // tm,),
        in_specs=[
            pl.BlockSpec((tm, H), lambda i: (i, 0)),
            _const_spec((1, H), lambda i: (0, 0)),
            _const_spec((1, H), lambda i: (0, 0)),
        ],
        out_specs=pl.BlockSpec((tm, H), lambda i: (i, 0)),
        compiler_params=_cp(("parallel",)),
    )(x, g.reshape(1, H), b.reshape(1, H))


def pallas_attention_block(x2, wqkv, bqkv, *, n_heads, B, S):
    """x2: (B*S, H) bf16 -> attention context (B*S, H) bf16 (QKV proj fused)."""
    H = x2.shape[1]
    kern = functools.partial(_attn_block_kernel, n_heads=n_heads,
                             scale=1.0 / math.sqrt(H // n_heads))
    return pl.pallas_call(
        kern,
        out_shape=jax.ShapeDtypeStruct((B * S, H), jnp.bfloat16),
        grid=(B,),
        in_specs=[
            pl.BlockSpec((S, H), lambda b: (b, 0)),
            _const_spec((H, 3 * H), lambda b: (0, 0)),   # fused QKV weight, resident
            _const_spec((1, 3 * H), lambda b: (0, 0)),
        ],
        out_specs=pl.BlockSpec((S, H), lambda b: (b, 0)),   # lane-dense (S, H) store
        compiler_params=_cp(("parallel",)),
    )(x2, wqkv, bqkv.reshape(1, 3 * H))


# ----------------------------------------------------------------------------
# Model (glue in plain JAX: embedding gathers, [CLS] selection, slicing)
# ----------------------------------------------------------------------------

def init_params(key, *, vocab, hidden, n_layers, inter, max_pos, out_dim):
    ks = iter(jax.random.split(key, 8 + 8 * n_layers))
    nrm = lambda shape: (0.02 * jax.random.normal(next(ks), shape)).astype(jnp.float32)
    nrm16 = lambda shape: nrm(shape).astype(jnp.bfloat16)          # matmul weights
    zeros = lambda shape: jnp.zeros(shape, jnp.float32)
    ones = lambda shape: jnp.ones(shape, jnp.float32)

    # classifier weight padded to a 128-wide lane-dense output; sliced later
    out_pad = max(128, out_dim)
    wc = jnp.zeros((hidden, out_pad), jnp.float32).at[:, :out_dim].set(
        nrm((hidden, out_dim)))

    params = {
        "word_emb": nrm((vocab, hidden)),
        "pos_emb": nrm((max_pos, hidden)),
        "type_emb": nrm((2, hidden)),
        "emb_ln_g": ones((hidden,)), "emb_ln_b": zeros((hidden,)),
        "layers": [],
        "wc": wc.astype(jnp.bfloat16), "bc": zeros((out_pad,)),
    }
    for _ in range(n_layers):
        params["layers"].append({
            "wqkv": nrm16((hidden, 3 * hidden)), "bqkv": zeros((3 * hidden,)),
            "wo": nrm16((hidden, hidden)), "bo": zeros((hidden,)),
            "ln1_g": ones((hidden,)), "ln1_b": zeros((hidden,)),
            "w1": nrm16((hidden, inter)), "b1": zeros((inter,)),
            "w2": nrm16((inter, hidden)), "b2": zeros((hidden,)),
            "ln2_g": ones((hidden,)), "ln2_b": zeros((hidden,)),
        })
    return params


def encoder_layer(lp, x2, B, S, n_heads):
    # fused QKV projection + attention: one launch, lane-dense (S, H) output,
    # no XLA-side head split/merge transposes, qkv never touches HBM
    ctx = pallas_attention_block(x2, lp["wqkv"], lp["bqkv"], n_heads=n_heads, B=B, S=S)

    # attention output projection + residual + LayerNorm fused
    x2 = pallas_linear_res_ln(ctx, lp["wo"], lp["bo"], x2, lp["ln1_g"], lp["ln1_b"])

    # FFN: GELU matmul, then second matmul + residual + LayerNorm fused
    inter = pallas_linear(x2, lp["w1"], lp["b1"], activation="gelu")
    x2 = pallas_linear_res_ln(inter, lp["w2"], lp["b2"], x2, lp["ln2_g"], lp["ln2_b"])
    return x2


def net_forward(params, token_ids, *, n_heads, out_dim):
    """token_ids: (B, S) int32  ->  logits (B, out_dim) f32."""
    B, S = token_ids.shape
    H = params["word_emb"].shape[1]

    # BERT embeddings (gather = glue in plain JAX)
    emb = (params["word_emb"][token_ids]
           + params["pos_emb"][:S][None, :, :]
           + params["type_emb"][0][None, None, :])
    x2 = pallas_layernorm(emb.reshape(B * S, H),
                          params["emb_ln_g"], params["emb_ln_b"])   # bf16 activations

    for lp in params["layers"]:
        x2 = encoder_layer(lp, x2, B, S, n_heads)

    cls = x2.reshape(B, S, H)[:, 0, :]              # x = self.emb(x)[0][:, 0, :]
    m_pad = max(8, ((B + 7) // 8) * 8)              # sublane-aligned classifier tile
    if m_pad != B:
        cls = jnp.pad(cls, ((0, m_pad - B), (0, 0)))
    logits_pad = pallas_linear(cls, params["wc"], params["bc"],
                               out_dtype=jnp.float32)   # lane-dense padded logits
    return logits_pad[:B, :out_dim]


# ----------------------------------------------------------------------------

if __name__ == "__main__":
    key = jax.random.PRNGKey(0)
    k_params, k_ids = jax.random.split(key)

    B, S = 2, 8
    VOCAB, HIDDEN, LAYERS, HEADS, INTER, MAX_POS, OUT = 100, 128, 2, 2, 512, 32, 2

    params = init_params(k_params, vocab=VOCAB, hidden=HIDDEN, n_layers=LAYERS,
                         inter=INTER, max_pos=MAX_POS, out_dim=OUT)
    token_ids = jax.random.randint(k_ids, (B, S), 0, VOCAB, dtype=jnp.int32)

    fwd = jax.jit(functools.partial(net_forward, n_heads=HEADS, out_dim=OUT))
    logits = fwd(params, token_ids)
    jax.block_until_ready(logits)
    assert logits.shape == (B, OUT) and logits.dtype == jnp.float32
    print("KERNEL_OK")
</pallas_src>

<mosaic_0001>
module attributes {stable_mosaic.version = 11 : i64} {
  func.func @_probe_copy_kernel(%arg0: i32, %arg1: memref<8x128xf32, #tpu.memory_space<vmem>>, %arg2: memref<8x128xf32, #tpu.memory_space<vmem>>) attributes {dimension_semantics = [#tpu.dimension_semantics<arbitrary>], iteration_bounds = array<i64: 2>, scalar_prefetch = 0 : i64, scratch_operands = 0 : i64, tpu.core_type = #tpu.core_type<tc>, window_params = [{pipeline_mode = #tpu.pipeline_mode<synchronous>, transform_indices = @transform_0, window_bounds = array<i64: 8, 128>}, {pipeline_mode = #tpu.pipeline_mode<synchronous>, transform_indices = @transform_1, window_bounds = array<i64: 8, 128>}]} {
    %c0 = arith.constant 0 : index
    %c0_0 = arith.constant 0 : index
    %0 = vector.load %arg1[%c0, %c0_0] : memref<8x128xf32, #tpu.memory_space<vmem>>, vector<8x128xf32>
    %c0_1 = arith.constant 0 : index
    %c0_2 = arith.constant 0 : index
    %1 = vector.load %arg2[%c0_1, %c0_2] : memref<8x128xf32, #tpu.memory_space<vmem>>, vector<8x128xf32>
    tpu.vector_store %arg2[%c0_1, %c0_2], %0 {strides = array<i32>} : memref<8x128xf32, #tpu.memory_space<vmem>>, vector<8x128xf32>,
    return
  }
  func.func @transform_0(%arg0: i32) -> (i32, i32) {
    %c0_i32 = arith.constant 0 : i32
    %c0_i32_0 = arith.constant 0 : i32
    %c0_i32_1 = arith.constant 0 : i32
    return %c0_i32, %c0_i32_0 : i32, i32
  }
  func.func @transform_1(%arg0: i32) -> (i32, i32) {
    %c0_i32 = arith.constant 0 : i32
    %c0_i32_0 = arith.constant 0 : i32
    %c0_i32_1 = arith.constant 0 : i32
    return %c0_i32, %c0_i32_0 : i32, i32
  }
}

module attributes {stable_mosaic.version = 11 : i64} {
  func.func @_attn_block_kernel(%arg0: i32, %arg1: memref<8x128xbf16, #tpu.memory_space<vmem>>, %arg2: memref<128x384xbf16, #tpu.memory_space<vmem>>, %arg3: memref<1x384xf32, #tpu.memory_space<vmem>>, %arg4: memref<8x128xbf16, #tpu.memory_space<vmem>>) attributes {dimension_semantics = [#tpu.dimension_semantics<parallel>], iteration_bounds = array<i64: 2>, scalar_prefetch = 0 : i64, scratch_operands = 0 : i64, tpu.core_type = #tpu.core_type<tc>, window_params = [{transform_indices = @transform_0, window_bounds = array<i64: 8, 128>}, {pipeline_mode = #tpu.pipeline_mode<synchronous>, transform_indices = @transform_1, window_bounds = array<i64: 128, 384>}, {pipeline_mode = #tpu.pipeline_mode<synchronous>, transform_indices = @transform_2, window_bounds = array<i64: 1, 384>}, {transform_indices = @transform_3, window_bounds = array<i64: 8, 128>}]} {
    %c0 = arith.constant 0 : index
    %c0_0 = arith.constant 0 : index
    %0 = vector.load %arg1[%c0, %c0_0] : memref<8x128xbf16, #tpu.memory_space<vmem>>, vector<8x128xbf16>
    %c0_1 = arith.constant 0 : index
    %c0_2 = arith.constant 0 : index
    %1 = vector.load %arg2[%c0_1, %c0_2] : memref<128x384xbf16, #tpu.memory_space<vmem>>, vector<128x384xbf16>
    %cst = arith.constant dense<0.000000e+00> : vector<8x384xf32>
    %2 = tpu.matmul %0, %1, %cst {dimension_numbers = #tpu.dot_dimension_numbers<[1], [0], [0], [1], [0, 0, 1, 1], [], []>} : vector<8x128xbf16>, vector<128x384xbf16>, vector<8x384xf32> -> vector<8x384xf32>
    %c0_3 = arith.constant 0 : index
    %c0_4 = arith.constant 0 : index
    %3 = vector.load %arg3[%c0_3, %c0_4] : memref<1x384xf32, #tpu.memory_space<vmem>>, vector<1x384xf32>
    %4 = vector.broadcast %3 : vector<1x384xf32> to vector<8x384xf32>
    %5 = arith.addf %2, %4 : vector<8x384xf32>
    %6 = vector.extract_strided_slice %5 {offsets = [0, 0], sizes = [8, 64], strides = [1, 1]} : vector<8x384xf32> to vector<8x64xf32>
    %cst_5 = arith.constant 1.250000e-01 : f32
    %7 = vector.broadcast %cst_5 : f32 to vector<8x64xf32>
    %8 = arith.mulf %6, %7 : vector<8x64xf32>
    %9 = arith.truncf %8 : vector<8x64xf32> to vector<8x64xbf16>
    %10 = vector.extract_strided_slice %5 {offsets = [0, 128], sizes = [8, 64], strides = [1, 1]} : vector<8x384xf32> to vector<8x64xf32>
    %11 = arith.truncf %10 : vector<8x64xf32> to vector<8x64xbf16>
    %12 = vector.extract_strided_slice %5 {offsets = [0, 256], sizes = [8, 64], strides = [1, 1]} : vector<8x384xf32> to vector<8x64xf32>
    %13 = arith.truncf %12 : vector<8x64xf32> to vector<8x64xbf16>
    %cst_6 = arith.constant dense<0.000000e+00> : vector<8x8xf32>
    %14 = tpu.matmul %9, %11, %cst_6 {dimension_numbers = #tpu.dot_dimension_numbers<[1], [1], [0], [0], [0, 0, 1, 0], [], []>} : vector<8x64xbf16>, vector<8x64xbf16>, vector<8x8xf32> -> vector<8x8xf32>
    %cst_7 = arith.constant dense<0xFF800000> : vector<8xf32>
    %15 = vector.multi_reduction <maximumf>, %14, %cst_7 [1] : vector<8x8xf32> to vector<8xf32>
    %16 = vector.shape_cast %15 : vector<8xf32> to vector<8x1xf32>
    %17 = vector.broadcast %16 : vector<8x1xf32> to vector<8x8xf32>
    %18 = arith.subf %14, %17 : vector<8x8xf32>
    %19 = math.exp %18 : vector<8x8xf32>
    %cst_8 = arith.constant dense<0.000000e+00> : vector<8xf32>
    %20 = vector.multi_reduction <add>, %19, %cst_8 [1] : vector<8x8xf32> to vector<8xf32>
    %21 = vector.shape_cast %20 : vector<8xf32> to vector<8x1xf32>
    %22 = tpu.reciprocal %21 {approx = true} : vector<8x1xf32> -> vector<8x1xf32>
    %23 = vector.broadcast %22 : vector<8x1xf32> to vector<8x8xf32>
    %24 = arith.mulf %19, %23 : vector<8x8xf32>
    %25 = arith.truncf %24 : vector<8x8xf32> to vector<8x8xbf16>
    %cst_9 = arith.constant dense<0.000000e+00> : vector<8x64xf32>
    %26 = tpu.matmul %25, %13, %cst_9 {dimension_numbers = #tpu.dot_dimension_numbers<[1], [0], [0], [1], [0, 0, 1, 1], [], []>} : vector<8x8xbf16>, vector<8x64xbf16>, vector<8x64xf32> -> vector<8x64xf32>
    %27 = vector.extract_strided_slice %5 {offsets = [0, 64], sizes = [8, 64], strides = [1, 1]} : vector<8x384xf32> to vector<8x64xf32>
    %cst_10 = arith.constant 1.250000e-01 : f32
    %28 = vector.broadcast %cst_10 : f32 to vector<8x64xf32>
    %29 = arith.mulf %27, %28 : vector<8x64xf32>
    %30 = arith.truncf %29 : vector<8x64xf32> to vector<8x64xbf16>
    %31 = vector.extract_strided_slice %5 {offsets = [0, 192], sizes = [8, 64], strides = [1, 1]} : vector<8x384xf32> to vector<8x64xf32>
    %32 = arith.truncf %31 : vector<8x64xf32> to vector<8x64xbf16>
    %33 = vector.extract_strided_slice %5 {offsets = [0, 320], sizes = [8, 64], strides = [1, 1]} : vector<8x384xf32> to vector<8x64xf32>
    %34 = arith.truncf %33 : vector<8x64xf32> to vector<8x64xbf16>
    %cst_11 = arith.constant dense<0.000000e+00> : vector<8x8xf32>
    %35 = tpu.matmul %30, %32, %cst_11 {dimension_numbers = #tpu.dot_dimension_numbers<[1], [1], [0], [0], [0, 0, 1, 0], [], []>} : vector<8x64xbf16>, vector<8x64xbf16>, vector<8x8xf32> -> vector<8x8xf32>
    %cst_12 = arith.constant dense<0xFF800000> : vector<8xf32>
    %36 = vector.multi_reduction <maximumf>, %35, %cst_12 [1] : vector<8x8xf32> to vector<8xf32>
    %37 = vector.shape_cast %36 : vector<8xf32> to vector<8x1xf32>
    %38 = vector.broadcast %37 : vector<8x1xf32> to vector<8x8xf32>
    %39 = arith.subf %35, %38 : vector<8x8xf32>
    %40 = math.exp %39 : vector<8x8xf32>
    %cst_13 = arith.constant dense<0.000000e+00> : vector<8xf32>
    %41 = vector.multi_reduction <add>, %40, %cst_13 [1] : vector<8x8xf32> to vector<8xf32>
    %42 = vector.shape_cast %41 : vector<8xf32> to vector<8x1xf32>
    %43 = tpu.reciprocal %42 {approx = true} : vector<8x1xf32> -> vector<8x1xf32>
    %44 = vector.broadcast %43 : vector<8x1xf32> to vector<8x8xf32>
    %45 = arith.mulf %40, %44 : vector<8x8xf32>
    %46 = arith.truncf %45 : vector<8x8xf32> to vector<8x8xbf16>
    %cst_14 = arith.constant dense<0.000000e+00> : vector<8x64xf32>
    %47 = tpu.matmul %46, %34, %cst_14 {dimension_numbers = #tpu.dot_dimension_numbers<[1], [0], [0], [1], [0, 0, 1, 1], [], []>} : vector<8x8xbf16>, vector<8x64xbf16>, vector<8x64xf32> -> vector<8x64xf32>
    %48 = tpu.concatenate %26, %47 in 1 : vector<8x64xf32>, vector<8x64xf32> -> vector<8x128xf32>
    %49 = arith.truncf %48 : vector<8x128xf32> to vector<8x128xbf16>
    %c0_15 = arith.constant 0 : index
    %c0_16 = arith.constant 0 : index
    %50 = vector.load %arg4[%c0_15, %c0_16] : memref<8x128xbf16, #tpu.memory_space<vmem>>, vector<8x128xbf16>
    tpu.vector_store %arg4[%c0_15, %c0_16], %49 {strides = array<i32>} : memref<8x128xbf16, #tpu.memory_space<vmem>>, vector<8x128xbf16>,
    return
  }
  func.func @transform_0(%arg0: i32) -> (i32, i32) {
    %c0_i32 = arith.constant 0 : i32
    %c0_i32_0 = arith.constant 0 : i32
    return %arg0, %c0_i32 : i32, i32
  }
  func.func @transform_1(%arg0: i32) -> (i32, i32) {
    %c0_i32 = arith.constant 0 : i32
    %c0_i32_0 = arith.constant 0 : i32
    %c0_i32_1 = arith.constant 0 : i32
    return %c0_i32, %c0_i32_0 : i32, i32
  }
  func.func @transform_2(%arg0: i32) -> (i32, i32) {
    %c0_i32 = arith.constant 0 : i32
    %c0_i32_0 = arith.constant 0 : i32
    %c0_i32_1 = arith.constant 0 : i32
    return %c0_i32, %c0_i32_0 : i32, i32
  }
  func.func @transform_3(%arg0: i32) -> (i32, i32) {
    %c0_i32 = arith.constant 0 : i32
    %c0_i32_0 = arith.constant 0 : i32
    return %arg0, %c0_i32 : i32, i32
  }
}

module attributes {stable_mosaic.version = 11 : i64} {
  func.func @_layernorm_kernel(%arg0: i32, %arg1: memref<16x128xf32, #tpu.memory_space<vmem>>, %arg2: memref<1x128xf32, #tpu.memory_space<vmem>>, %arg3: memref<1x128xf32, #tpu.memory_space<vmem>>, %arg4: memref<16x128xbf16, #tpu.memory_space<vmem>>) attributes {dimension_semantics = [#tpu.dimension_semantics<parallel>], iteration_bounds = array<i64: 1>, scalar_prefetch = 0 : i64, scratch_operands = 0 : i64, tpu.core_type = #tpu.core_type<tc>, window_params = [{transform_indices = @transform_0, window_bounds = array<i64: 16, 128>}, {pipeline_mode = #tpu.pipeline_mode<synchronous>, transform_indices = @transform_1, window_bounds = array<i64: 1, 128>}, {pipeline_mode = #tpu.pipeline_mode<synchronous>, transform_indices = @transform_2, window_bounds = array<i64: 1, 128>}, {transform_indices = @transform_3, window_bounds = array<i64: 16, 128>}]} {
    %c0 = arith.constant 0 : index
    %c0_0 = arith.constant 0 : index
    %0 = vector.load %arg1[%c0, %c0_0] : memref<16x128xf32, #tpu.memory_space<vmem>>, vector<16x128xf32>
    %cst = arith.constant dense<0.000000e+00> : vector<16xf32>
    %1 = vector.multi_reduction <add>, %0, %cst [1] : vector<16x128xf32> to vector<16xf32>
    %2 = vector.shape_cast %1 : vector<16xf32> to vector<16x1xf32>
    %cst_1 = arith.constant 1.280000e+02 : f32
    %3 = vector.broadcast %cst_1 : f32 to vector<16x1xf32>
    %4 = arith.divf %2, %3 : vector<16x1xf32>
    %5 = vector.broadcast %4 : vector<16x1xf32> to vector<16x128xf32>
    %6 = arith.subf %0, %5 : vector<16x128xf32>
    %7 = arith.mulf %6, %6 : vector<16x128xf32>
    %cst_2 = arith.constant dense<0.000000e+00> : vector<16xf32>
    %8 = vector.multi_reduction <add>, %7, %cst_2 [1] : vector<16x128xf32> to vector<16xf32>
    %9 = vector.shape_cast %8 : vector<16xf32> to vector<16x1xf32>
    %cst_3 = arith.constant 1.280000e+02 : f32
    %10 = vector.broadcast %cst_3 : f32 to vector<16x1xf32>
    %11 = arith.divf %9, %10 : vector<16x1xf32>
    %cst_4 = arith.constant 9.99999996E-13 : f32
    %12 = vector.broadcast %cst_4 : f32 to vector<16x1xf32>
    %13 = arith.addf %11, %12 : vector<16x1xf32>
    %14 = math.rsqrt %13 : vector<16x1xf32>
    %15 = vector.broadcast %14 : vector<16x1xf32> to vector<16x128xf32>
    %16 = arith.mulf %6, %15 : vector<16x128xf32>
    %c0_5 = arith.constant 0 : index
    %c0_6 = arith.constant 0 : index
    %17 = vector.load %arg2[%c0_5, %c0_6] : memref<1x128xf32, #tpu.memory_space<vmem>>, vector<1x128xf32>
    %18 = vector.broadcast %17 : vector<1x128xf32> to vector<16x128xf32>
    %19 = arith.mulf %16, %18 : vector<16x128xf32>
    %c0_7 = arith.constant 0 : index
    %c0_8 = arith.constant 0 : index
    %20 = vector.load %arg3[%c0_7, %c0_8] : memref<1x128xf32, #tpu.memory_space<vmem>>, vector<1x128xf32>
    %21 = vector.broadcast %20 : vector<1x128xf32> to vector<16x128xf32>
    %22 = arith.addf %19, %21 : vector<16x128xf32>
    %23 = arith.truncf %22 : vector<16x128xf32> to vector<16x128xbf16>
    %c0_9 = arith.constant 0 : index
    %c0_10 = arith.constant 0 : index
    %24 = vector.load %arg4[%c0_9, %c0_10] : memref<16x128xbf16, #tpu.memory_space<vmem>>, vector<16x128xbf16>
    tpu.vector_store %arg4[%c0_9, %c0_10], %23 {strides = array<i32>} : memref<16x128xbf16, #tpu.memory_space<vmem>>, vector<16x128xbf16>,
    return
  }
  func.func @transform_0(%arg0: i32) -> (i32, i32) {
    %c0_i32 = arith.constant 0 : i32
    %c0_i32_0 = arith.constant 0 : i32
    return %arg0, %c0_i32 : i32, i32
  }
  func.func @transform_1(%arg0: i32) -> (i32, i32) {
    %c0_i32 = arith.constant 0 : i32
    %c0_i32_0 = arith.constant 0 : i32
    %c0_i32_1 = arith.constant 0 : i32
    return %c0_i32, %c0_i32_0 : i32, i32
  }
  func.func @transform_2(%arg0: i32) -> (i32, i32) {
    %c0_i32 = arith.constant 0 : i32
    %c0_i32_0 = arith.constant 0 : i32
    %c0_i32_1 = arith.constant 0 : i32
    return %c0_i32, %c0_i32_0 : i32, i32
  }
  func.func @transform_3(%arg0: i32) -> (i32, i32) {
    %c0_i32 = arith.constant 0 : i32
    %c0_i32_0 = arith.constant 0 : i32
    return %arg0, %c0_i32 : i32, i32
  }
}

module attributes {stable_mosaic.version = 11 : i64} {
  func.func @_linear_res_ln_kernel(%arg0: i32, %arg1: memref<16x128xbf16, #tpu.memory_space<vmem>>, %arg2: memref<128x128xbf16, #tpu.memory_space<vmem>>, %arg3: memref<1x128xf32, #tpu.memory_space<vmem>>, %arg4: memref<16x128xbf16, #tpu.memory_space<vmem>>, %arg5: memref<1x128xf32, #tpu.memory_space<vmem>>, %arg6: memref<1x128xf32, #tpu.memory_space<vmem>>, %arg7: memref<16x128xbf16, #tpu.memory_space<vmem>>) attributes {dimension_semantics = [#tpu.dimension_semantics<parallel>], iteration_bounds = array<i64: 1>, scalar_prefetch = 0 : i64, scratch_operands = 0 : i64, tpu.core_type = #tpu.core_type<tc>, window_params = [{transform_indices = @transform_0, window_bounds = array<i64: 16, 128>}, {pipeline_mode = #tpu.pipeline_mode<synchronous>, transform_indices = @transform_1, window_bounds = array<i64: 128, 128>}, {pipeline_mode = #tpu.pipeline_mode<synchronous>, transform_indices = @transform_2, window_bounds = array<i64: 1, 128>}, {transform_indices = @transform_3, window_bounds = array<i64: 16, 128>}, {pipeline_mode = #tpu.pipeline_mode<synchronous>, transform_indices = @transform_4, window_bounds = array<i64: 1, 128>}, {pipeline_mode = #tpu.pipeline_mode<synchronous>, transform_indices = @transform_5, window_bounds = array<i64: 1, 128>}, {transform_indices = @transform_6, window_bounds = array<i64: 16, 128>}]} {
    %c0 = arith.constant 0 : index
    %c0_0 = arith.constant 0 : index
    %0 = vector.load %arg1[%c0, %c0_0] : memref<16x128xbf16, #tpu.memory_space<vmem>>, vector<16x128xbf16>
    %c0_1 = arith.constant 0 : index
    %c0_2 = arith.constant 0 : index
    %1 = vector.load %arg2[%c0_1, %c0_2] : memref<128x128xbf16, #tpu.memory_space<vmem>>, vector<128x128xbf16>
    %cst = arith.constant dense<0.000000e+00> : vector<16x128xf32>
    %2 = tpu.matmul %0, %1, %cst {dimension_numbers = #tpu.dot_dimension_numbers<[1], [0], [0], [1], [0, 0, 1, 1], [], []>} : vector<16x128xbf16>, vector<128x128xbf16>, vector<16x128xf32> -> vector<16x128xf32>
    %c0_3 = arith.constant 0 : index
    %c0_4 = arith.constant 0 : index
    %3 = vector.load %arg3[%c0_3, %c0_4] : memref<1x128xf32, #tpu.memory_space<vmem>>, vector<1x128xf32>
    %4 = vector.broadcast %3 : vector<1x128xf32> to vector<16x128xf32>
    %5 = arith.addf %2, %4 : vector<16x128xf32>
    %c0_5 = arith.constant 0 : index
    %c0_6 = arith.constant 0 : index
    %6 = vector.load %arg4[%c0_5, %c0_6] : memref<16x128xbf16, #tpu.memory_space<vmem>>, vector<16x128xbf16>
    %7 = arith.extf %6 : vector<16x128xbf16> to vector<16x128xf32>
    %8 = arith.addf %5, %7 : vector<16x128xf32>
    %cst_7 = arith.constant dense<0.000000e+00> : vector<16xf32>
    %9 = vector.multi_reduction <add>, %8, %cst_7 [1] : vector<16x128xf32> to vector<16xf32>
    %10 = vector.shape_cast %9 : vector<16xf32> to vector<16x1xf32>
    %cst_8 = arith.constant 1.280000e+02 : f32
    %11 = vector.broadcast %cst_8 : f32 to vector<16x1xf32>
    %12 = arith.divf %10, %11 : vector<16x1xf32>
    %13 = vector.broadcast %12 : vector<16x1xf32> to vector<16x128xf32>
    %14 = arith.subf %8, %13 : vector<16x128xf32>
    %15 = arith.mulf %14, %14 : vector<16x128xf32>
    %cst_9 = arith.constant dense<0.000000e+00> : vector<16xf32>
    %16 = vector.multi_reduction <add>, %15, %cst_9 [1] : vector<16x128xf32> to vector<16xf32>
    %17 = vector.shape_cast %16 : vector<16xf32> to vector<16x1xf32>
    %cst_10 = arith.constant 1.280000e+02 : f32
    %18 = vector.broadcast %cst_10 : f32 to vector<16x1xf32>
    %19 = arith.divf %17, %18 : vector<16x1xf32>
    %cst_11 = arith.constant 9.99999996E-13 : f32
    %20 = vector.broadcast %cst_11 : f32 to vector<16x1xf32>
    %21 = arith.addf %19, %20 : vector<16x1xf32>
    %22 = math.rsqrt %21 : vector<16x1xf32>
    %23 = vector.broadcast %22 : vector<16x1xf32> to vector<16x128xf32>
    %24 = arith.mulf %14, %23 : vector<16x128xf32>
    %c0_12 = arith.constant 0 : index
    %c0_13 = arith.constant 0 : index
    %25 = vector.load %arg5[%c0_12, %c0_13] : memref<1x128xf32, #tpu.memory_space<vmem>>, vector<1x128xf32>
    %26 = vector.broadcast %25 : vector<1x128xf32> to vector<16x128xf32>
    %27 = arith.mulf %24, %26 : vector<16x128xf32>
    %c0_14 = arith.constant 0 : index
    %c0_15 = arith.constant 0 : index
    %28 = vector.load %arg6[%c0_14, %c0_15] : memref<1x128xf32, #tpu.memory_space<vmem>>, vector<1x128xf32>
    %29 = vector.broadcast %28 : vector<1x128xf32> to vector<16x128xf32>
    %30 = arith.addf %27, %29 : vector<16x128xf32>
    %31 = arith.truncf %30 : vector<16x128xf32> to vector<16x128xbf16>
    %c0_16 = arith.constant 0 : index
    %c0_17 = arith.constant 0 : index
    %32 = vector.load %arg7[%c0_16, %c0_17] : memref<16x128xbf16, #tpu.memory_space<vmem>>, vector<16x128xbf16>
    tpu.vector_store %arg7[%c0_16, %c0_17], %31 {strides = array<i32>} : memref<16x128xbf16, #tpu.memory_space<vmem>>, vector<16x128xbf16>,
    return
  }
  func.func @transform_0(%arg0: i32) -> (i32, i32) {
    %c0_i32 = arith.constant 0 : i32
    %c0_i32_0 = arith.constant 0 : i32
    return %arg0, %c0_i32 : i32, i32
  }
  func.func @transform_1(%arg0: i32) -> (i32, i32) {
    %c0_i32 = arith.constant 0 : i32
    %c0_i32_0 = arith.constant 0 : i32
    %c0_i32_1 = arith.constant 0 : i32
    return %c0_i32, %c0_i32_0 : i32, i32
  }
  func.func @transform_2(%arg0: i32) -> (i32, i32) {
    %c0_i32 = arith.constant 0 : i32
    %c0_i32_0 = arith.constant 0 : i32
    %c0_i32_1 = arith.constant 0 : i32
    return %c0_i32, %c0_i32_0 : i32, i32
  }
  func.func @transform_3(%arg0: i32) -> (i32, i32) {
    %c0_i32 = arith.constant 0 : i32
    %c0_i32_0 = arith.constant 0 : i32
    return %arg0, %c0_i32 : i32, i32
  }
  func.func @transform_4(%arg0: i32) -> (i32, i32) {
    %c0_i32 = arith.constant 0 : i32
    %c0_i32_0 = arith.constant 0 : i32
    %c0_i32_1 = arith.constant 0 : i32
    return %c0_i32, %c0_i32_0 : i32, i32
  }
  func.func @transform_5(%arg0: i32) -> (i32, i32) {
    %c0_i32 = arith.constant 0 : i32
    %c0_i32_0 = arith.constant 0 : i32
    %c0_i32_1 = arith.constant 0 : i32
    return %c0_i32, %c0_i32_0 : i32, i32
  }
  func.func @transform_6(%arg0: i32) -> (i32, i32) {
    %c0_i32 = arith.constant 0 : i32
    %c0_i32_0 = arith.constant 0 : i32
    return %arg0, %c0_i32 : i32, i32
  }
}

module attributes {stable_mosaic.version = 11 : i64} {
  func.func @_linear_kernel(%arg0: i32, %arg1: i32, %arg2: memref<16x128xbf16, #tpu.memory_space<vmem>>, %arg3: memref<128x512xbf16, #tpu.memory_space<vmem>>, %arg4: memref<1x512xf32, #tpu.memory_space<vmem>>, %arg5: memref<16x512xbf16, #tpu.memory_space<vmem>>) attributes {dimension_semantics = [#tpu.dimension_semantics<parallel>, #tpu.dimension_semantics<parallel>], iteration_bounds = array<i64: 1, 1>, scalar_prefetch = 0 : i64, scratch_operands = 0 : i64, tpu.core_type = #tpu.core_type<tc>, window_params = [{transform_indices = @transform_0, window_bounds = array<i64: 16, 128>}, {transform_indices = @transform_1, window_bounds = array<i64: 128, 512>}, {transform_indices = @transform_2, window_bounds = array<i64: 1, 512>}, {transform_indices = @transform_3, window_bounds = array<i64: 16, 512>}]} {
    %c0 = arith.constant 0 : index
    %c0_0 = arith.constant 0 : index
    %0 = vector.load %arg2[%c0, %c0_0] : memref<16x128xbf16, #tpu.memory_space<vmem>>, vector<16x128xbf16>
    %c0_1 = arith.constant 0 : index
    %c0_2 = arith.constant 0 : index
    %1 = vector.load %arg3[%c0_1, %c0_2] : memref<128x512xbf16, #tpu.memory_space<vmem>>, vector<128x512xbf16>
    %cst = arith.constant dense<0.000000e+00> : vector<16x512xf32>
    %2 = tpu.matmul %0, %1, %cst {dimension_numbers = #tpu.dot_dimension_numbers<[1], [0], [0], [1], [0, 0, 1, 1], [], []>} : vector<16x128xbf16>, vector<128x512xbf16>, vector<16x512xf32> -> vector<16x512xf32>
    %c0_3 = arith.constant 0 : index
    %c0_4 = arith.constant 0 : index
    %3 = vector.load %arg4[%c0_3, %c0_4] : memref<1x512xf32, #tpu.memory_space<vmem>>, vector<1x512xf32>
    %4 = vector.broadcast %3 : vector<1x512xf32> to vector<16x512xf32>
    %5 = arith.addf %2, %4 : vector<16x512xf32>
    %cst_5 = arith.constant 5.000000e-01 : f32
    %6 = vector.broadcast %cst_5 : f32 to vector<16x512xf32>
    %7 = arith.mulf %6, %5 : vector<16x512xf32>
    %cst_6 = arith.constant 4.471500e-02 : f32
    %8 = vector.broadcast %cst_6 : f32 to vector<16x512xf32>
    %9 = arith.mulf %8, %5 : vector<16x512xf32>
    %10 = arith.mulf %9, %5 : vector<16x512xf32>
    %11 = arith.mulf %10, %5 : vector<16x512xf32>
    %12 = arith.addf %5, %11 : vector<16x512xf32>
    %cst_7 = arith.constant 0.797884583 : f32
    %13 = vector.broadcast %cst_7 : f32 to vector<16x512xf32>
    %14 = arith.mulf %13, %12 : vector<16x512xf32>
    %15 = math.tanh %14 : vector<16x512xf32>
    %cst_8 = arith.constant 1.000000e+00 : f32
    %16 = vector.broadcast %cst_8 : f32 to vector<16x512xf32>
    %17 = arith.addf %16, %15 : vector<16x512xf32>
    %18 = arith.mulf %7, %17 : vector<16x512xf32>
    %19 = arith.truncf %18 : vector<16x512xf32> to vector<16x512xbf16>
    %c0_9 = arith.constant 0 : index
    %c0_10 = arith.constant 0 : index
    %20 = vector.load %arg5[%c0_9, %c0_10] : memref<16x512xbf16, #tpu.memory_space<vmem>>, vector<16x512xbf16>
    tpu.vector_store %arg5[%c0_9, %c0_10], %19 {strides = array<i32>} : memref<16x512xbf16, #tpu.memory_space<vmem>>, vector<16x512xbf16>,
    return
  }
  func.func @transform_0(%arg0: i32, %arg1: i32) -> (i32, i32) {
    %c0_i32 = arith.constant 0 : i32
    %c0_i32_0 = arith.constant 0 : i32
    return %arg0, %c0_i32 : i32, i32
  }
  func.func @transform_1(%arg0: i32, %arg1: i32) -> (i32, i32) {
    %c0_i32 = arith.constant 0 : i32
    %c0_i32_0 = arith.constant 0 : i32
    return %c0_i32, %arg1 : i32, i32
  }
  func.func @transform_2(%arg0: i32, %arg1: i32) -> (i32, i32) {
    %c0_i32 = arith.constant 0 : i32
    %c0_i32_0 = arith.constant 0 : i32
    return %c0_i32, %arg1 : i32, i32
  }
  func.func @transform_3(%arg0: i32, %arg1: i32) -> (i32, i32) {
    %c0_i32 = arith.constant 0 : i32
    return %arg0, %arg1 : i32, i32
  }
}

module attributes {stable_mosaic.version = 11 : i64} {
  func.func @_linear_kernel(%arg0: i32, %arg1: i32, %arg2: memref<8x128xbf16, #tpu.memory_space<vmem>>, %arg3: memref<128x128xbf16, #tpu.memory_space<vmem>>, %arg4: memref<1x128xf32, #tpu.memory_space<vmem>>, %arg5: memref<8x128xf32, #tpu.memory_space<vmem>>) attributes {dimension_semantics = [#tpu.dimension_semantics<parallel>, #tpu.dimension_semantics<parallel>], iteration_bounds = array<i64: 1, 1>, scalar_prefetch = 0 : i64, scratch_operands = 0 : i64, tpu.core_type = #tpu.core_type<tc>, window_params = [{transform_indices = @transform_0, window_bounds = array<i64: 8, 128>}, {transform_indices = @transform_1, window_bounds = array<i64: 128, 128>}, {transform_indices = @transform_2, window_bounds = array<i64: 1, 128>}, {transform_indices = @transform_3, window_bounds = array<i64: 8, 128>}]} {
    %c0 = arith.constant 0 : index
    %c0_0 = arith.constant 0 : index
    %0 = vector.load %arg2[%c0, %c0_0] : memref<8x128xbf16, #tpu.memory_space<vmem>>, vector<8x128xbf16>
    %c0_1 = arith.constant 0 : index
    %c0_2 = arith.constant 0 : index
    %1 = vector.load %arg3[%c0_1, %c0_2] : memref<128x128xbf16, #tpu.memory_space<vmem>>, vector<128x128xbf16>
    %cst = arith.constant dense<0.000000e+00> : vector<8x128xf32>
    %2 = tpu.matmul %0, %1, %cst {dimension_numbers = #tpu.dot_dimension_numbers<[1], [0], [0], [1], [0, 0, 1, 1], [], []>} : vector<8x128xbf16>, vector<128x128xbf16>, vector<8x128xf32> -> vector<8x128xf32>
    %c0_3 = arith.constant 0 : index
    %c0_4 = arith.constant 0 : index
    %3 = vector.load %arg4[%c0_3, %c0_4] : memref<1x128xf32, #tpu.memory_space<vmem>>, vector<1x128xf32>
    %4 = vector.broadcast %3 : vector<1x128xf32> to vector<8x128xf32>
    %5 = arith.addf %2, %4 : vector<8x128xf32>
    %c0_5 = arith.constant 0 : index
    %c0_6 = arith.constant 0 : index
    %6 = vector.load %arg5[%c0_5, %c0_6] : memref<8x128xf32, #tpu.memory_space<vmem>>, vector<8x128xf32>
    tpu.vector_store %arg5[%c0_5, %c0_6], %5 {strides = array<i32>} : memref<8x128xf32, #tpu.memory_space<vmem>>, vector<8x128xf32>,
    return
  }
  func.func @transform_0(%arg0: i32, %arg1: i32) -> (i32, i32) {
    %c0_i32 = arith.constant 0 : i32
    %c0_i32_0 = arith.constant 0 : i32
    return %arg0, %c0_i32 : i32, i32
  }
  func.func @transform_1(%arg0: i32, %arg1: i32) -> (i32, i32) {
    %c0_i32 = arith.constant 0 : i32
    %c0_i32_0 = arith.constant 0 : i32
    return %c0_i32, %arg1 : i32, i32
  }
  func.func @transform_2(%arg0: i32, %arg1: i32) -> (i32, i32) {
    %c0_i32 = arith.constant 0 : i32
    %c0_i32_0 = arith.constant 0 : i32
    return %c0_i32, %arg1 : i32, i32
  }
  func.func @transform_3(%arg0: i32, %arg1: i32) -> (i32, i32) {
    %c0_i32 = arith.constant 0 : i32
    return %arg0, %arg1 : i32, i32
  }
}

module attributes {stable_mosaic.version = 11 : i64} {
  func.func @_linear_res_ln_kernel(%arg0: i32, %arg1: memref<16x512xbf16, #tpu.memory_space<vmem>>, %arg2: memref<512x128xbf16, #tpu.memory_space<vmem>>, %arg3: memref<1x128xf32, #tpu.memory_space<vmem>>, %arg4: memref<16x128xbf16, #tpu.memory_space<vmem>>, %arg5: memref<1x128xf32, #tpu.memory_space<vmem>>, %arg6: memref<1x128xf32, #tpu.memory_space<vmem>>, %arg7: memref<16x128xbf16, #tpu.memory_space<vmem>>) attributes {dimension_semantics = [#tpu.dimension_semantics<parallel>], iteration_bounds = array<i64: 1>, scalar_prefetch = 0 : i64, scratch_operands = 0 : i64, tpu.core_type = #tpu.core_type<tc>, window_params = [{transform_indices = @transform_0, window_bounds = array<i64: 16, 512>}, {pipeline_mode = #tpu.pipeline_mode<synchronous>, transform_indices = @transform_1, window_bounds = array<i64: 512, 128>}, {pipeline_mode = #tpu.pipeline_mode<synchronous>, transform_indices = @transform_2, window_bounds = array<i64: 1, 128>}, {transform_indices = @transform_3, window_bounds = array<i64: 16, 128>}, {pipeline_mode = #tpu.pipeline_mode<synchronous>, transform_indices = @transform_4, window_bounds = array<i64: 1, 128>}, {pipeline_mode = #tpu.pipeline_mode<synchronous>, transform_indices = @transform_5, window_bounds = array<i64: 1, 128>}, {transform_indices = @transform_6, window_bounds = array<i64: 16, 128>}]} {
    %c0 = arith.constant 0 : index
    %c0_0 = arith.constant 0 : index
    %0 = vector.load %arg1[%c0, %c0_0] : memref<16x512xbf16, #tpu.memory_space<vmem>>, vector<16x512xbf16>
    %c0_1 = arith.constant 0 : index
    %c0_2 = arith.constant 0 : index
    %1 = vector.load %arg2[%c0_1, %c0_2] : memref<512x128xbf16, #tpu.memory_space<vmem>>, vector<512x128xbf16>
    %cst = arith.constant dense<0.000000e+00> : vector<16x128xf32>
    %2 = tpu.matmul %0, %1, %cst {dimension_numbers = #tpu.dot_dimension_numbers<[1], [0], [0], [1], [0, 0, 1, 1], [], []>} : vector<16x512xbf16>, vector<512x128xbf16>, vector<16x128xf32> -> vector<16x128xf32>
    %c0_3 = arith.constant 0 : index
    %c0_4 = arith.constant 0 : index
    %3 = vector.load %arg3[%c0_3, %c0_4] : memref<1x128xf32, #tpu.memory_space<vmem>>, vector<1x128xf32>
    %4 = vector.broadcast %3 : vector<1x128xf32> to vector<16x128xf32>
    %5 = arith.addf %2, %4 : vector<16x128xf32>
    %c0_5 = arith.constant 0 : index
    %c0_6 = arith.constant 0 : index
    %6 = vector.load %arg4[%c0_5, %c0_6] : memref<16x128xbf16, #tpu.memory_space<vmem>>, vector<16x128xbf16>
    %7 = arith.extf %6 : vector<16x128xbf16> to vector<16x128xf32>
    %8 = arith.addf %5, %7 : vector<16x128xf32>
    %cst_7 = arith.constant dense<0.000000e+00> : vector<16xf32>
    %9 = vector.multi_reduction <add>, %8, %cst_7 [1] : vector<16x128xf32> to vector<16xf32>
    %10 = vector.shape_cast %9 : vector<16xf32> to vector<16x1xf32>
    %cst_8 = arith.constant 1.280000e+02 : f32
    %11 = vector.broadcast %cst_8 : f32 to vector<16x1xf32>
    %12 = arith.divf %10, %11 : vector<16x1xf32>
    %13 = vector.broadcast %12 : vector<16x1xf32> to vector<16x128xf32>
    %14 = arith.subf %8, %13 : vector<16x128xf32>
    %15 = arith.mulf %14, %14 : vector<16x128xf32>
    %cst_9 = arith.constant dense<0.000000e+00> : vector<16xf32>
    %16 = vector.multi_reduction <add>, %15, %cst_9 [1] : vector<16x128xf32> to vector<16xf32>
    %17 = vector.shape_cast %16 : vector<16xf32> to vector<16x1xf32>
    %cst_10 = arith.constant 1.280000e+02 : f32
    %18 = vector.broadcast %cst_10 : f32 to vector<16x1xf32>
    %19 = arith.divf %17, %18 : vector<16x1xf32>
    %cst_11 = arith.constant 9.99999996E-13 : f32
    %20 = vector.broadcast %cst_11 : f32 to vector<16x1xf32>
    %21 = arith.addf %19, %20 : vector<16x1xf32>
    %22 = math.rsqrt %21 : vector<16x1xf32>
    %23 = vector.broadcast %22 : vector<16x1xf32> to vector<16x128xf32>
    %24 = arith.mulf %14, %23 : vector<16x128xf32>
    %c0_12 = arith.constant 0 : index
    %c0_13 = arith.constant 0 : index
    %25 = vector.load %arg5[%c0_12, %c0_13] : memref<1x128xf32, #tpu.memory_space<vmem>>, vector<1x128xf32>
    %26 = vector.broadcast %25 : vector<1x128xf32> to vector<16x128xf32>
    %27 = arith.mulf %24, %26 : vector<16x128xf32>
    %c0_14 = arith.constant 0 : index
    %c0_15 = arith.constant 0 : index
    %28 = vector.load %arg6[%c0_14, %c0_15] : memref<1x128xf32, #tpu.memory_space<vmem>>, vector<1x128xf32>
    %29 = vector.broadcast %28 : vector<1x128xf32> to vector<16x128xf32>
    %30 = arith.addf %27, %29 : vector<16x128xf32>
    %31 = arith.truncf %30 : vector<16x128xf32> to vector<16x128xbf16>
    %c0_16 = arith.constant 0 : index
    %c0_17 = arith.constant 0 : index
    %32 = vector.load %arg7[%c0_16, %c0_17] : memref<16x128xbf16, #tpu.memory_space<vmem>>, vector<16x128xbf16>
    tpu.vector_store %arg7[%c0_16, %c0_17], %31 {strides = array<i32>} : memref<16x128xbf16, #tpu.memory_space<vmem>>, vector<16x128xbf16>,
    return
  }
  func.func @transform_0(%arg0: i32) -> (i32, i32) {
    %c0_i32 = arith.constant 0 : i32
    %c0_i32_0 = arith.constant 0 : i32
    return %arg0, %c0_i32 : i32, i32
  }
  func.func @transform_1(%arg0: i32) -> (i32, i32) {
    %c0_i32 = arith.constant 0 : i32
    %c0_i32_0 = arith.constant 0 : i32
    %c0_i32_1 = arith.constant 0 : i32
    return %c0_i32, %c0_i32_0 : i32, i32
  }
  func.func @transform_2(%arg0: i32) -> (i32, i32) {
    %c0_i32 = arith.constant 0 : i32
    %c0_i32_0 = arith.constant 0 : i32
    %c0_i32_1 = arith.constant 0 : i32
    return %c0_i32, %c0_i32_0 : i32, i32
  }
  func.func @transform_3(%arg0: i32) -> (i32, i32) {
    %c0_i32 = arith.constant 0 : i32
    %c0_i32_0 = arith.constant 0 : i32
    return %arg0, %c0_i32 : i32, i32
  }
  func.func @transform_4(%arg0: i32) -> (i32, i32) {
    %c0_i32 = arith.constant 0 : i32
    %c0_i32_0 = arith.constant 0 : i32
    %c0_i32_1 = arith.constant 0 : i32
    return %c0_i32, %c0_i32_0 : i32, i32
  }
  func.func @transform_5(%arg0: i32) -> (i32, i32) {
    %c0_i32 = arith.constant 0 : i32
    %c0_i32_0 = arith.constant 0 : i32
    %c0_i32_1 = arith.constant 0 : i32
    return %c0_i32, %c0_i32_0 : i32, i32
  }
  func.func @transform_6(%arg0: i32) -> (i32, i32) {
    %c0_i32 = arith.constant 0 : i32
    %c0_i32_0 = arith.constant 0 : i32
    return %arg0, %c0_i32 : i32, i32
  }
}

</mosaic_0001>

<llo_original>
// kernel: tpu_custom_call.1
$region0: #{tpu_custom_call.1}
  #allocation0 [shape = 'u32[]', space=smem, size = 0x4, offset = 0x4, fixed_abs, tag = 'smem constant byte address 0x4 - core index']
  #allocation1 [shape = 'u32[72,128]{1,0:T(1,128)}', space=vmem, size = 0x9000, scoped, tag = 'internal scratch']
  %s0 = inlined_call_operand.hbm [shape: f32[8,128], index: 0, kind: input, shape index: {}]
  %s1 = inlined_call_operand.hbm [shape: f32[8,128], index: 1, kind: output, shape index: {}]
  %s2 = sld [smem:[#allocation0]]
  $region41: #{tpu_custom_call.1} parent=0
    _
  %s4 = ssub.s32 1, %s2
  %s5 = scalar_select 0, %s4, %s2
  $region1: #{tpu_custom_call.1} parent=0
    #allocation2 [shape = 'u8[4096]{0}', space=vmem, size = 0x1000, scoped, tag = 'input window, operand 0, single buffered']
    #allocation3 [shape = 's32[2]{0}', space=sflag, size = 0x8, scoped, tag = 'scoped memory for tpu_custom_call.1']
    #allocation4 [shape = 's32[2]{0}', space=sflag, size = 0x8, scoped, tag = 'scoped memory for tpu_custom_call.1']
    #allocation5 [shape = 'u8[4096]{0}', space=vmem, size = 0x1000, scoped, tag = 'output window, operand 0, single buffered']
    %6 = vsyncpa [#allocation3], 0
    %7 = vsyncpa [#allocation4], 0
    loop: start=0, step=1, limit=4
    $region2: #{tpu_custom_call.1} parent=1 // loop_pre_header
      _
    $region3: #{tpu_custom_call.1} parent=1 // loop_header
      %s9 = sphi 0, %s13
      %p10 = scmp.ge.s32.totalorder %s9, 4
      %s17 = sphi 0, %s17
      %s19 = sphi 0, %s17
      %s20 = sphi 0, %s19
      %s34 = sphi 0, %s20
      %s38 = sphi 0, %s38
      %s40 = sphi 0, %s38
      %s41 = sphi 0, %s40
      %s55 = sphi 0, %s41
    $region4: #{tpu_custom_call.1} parent=1 // loop_header_branch
      %12 = sbr.rel (%p10) target = $region8
    $region5: #{tpu_custom_call.1} parent=1 // loop_body
      %s14 = ssub.s32 %s9, 1
      %s15 = ssub.s32 %s9, 2
      %s16 = sadd.s32 %s9, 1
      %s18 = sadd.s32 %s17, 1
      %p21 = scmp.eq.s32.totalorder %s9, 1
      %p22 = scmp.ne.s32.totalorder %s17, %s19
      %p23 = scmp.eq.s32.totalorder %s9, 0
      %p24 = por %p22, %p23
      %p25 = scmp.ne.s32.totalorder %s17, %s19
      %p26 = scmp.eq.s32.totalorder %s14, 1
      %p27 = por %p25, %p26
      %p28 = scmp.ne.s32.totalorder %s19, %s20
      %p29 = scmp.eq.s32.totalorder %s14, 0
      %p30 = por %p28, %p29
      %p31 = scmp.ne.s32.totalorder %s19, %s20
      %p32 = scmp.eq.s32.totalorder %s15, 1
      %p33 = por %p31, %p32
      %p35 = scmp.ne.s32.totalorder %s20, %s34
      %p36 = scmp.eq.s32.totalorder %s15, 0
      %p37 = por %p35, %p36
      %s39 = sadd.s32 %s38, 1
      %p42 = scmp.eq.s32.totalorder %s9, 1
      %p43 = scmp.ne.s32.totalorder %s38, %s40
      %p44 = scmp.eq.s32.totalorder %s9, 0
      %p45 = por %p43, %p44
      %p46 = scmp.ne.s32.totalorder %s38, %s40
      %p47 = scmp.eq.s32.totalorder %s14, 1
      %p48 = por %p46, %p47
      %p49 = scmp.ne.s32.totalorder %s40, %s41
      %p50 = scmp.eq.s32.totalorder %s14, 0
      %p51 = por %p49, %p50
      %p52 = scmp.ne.s32.totalorder %s40, %s41
      %p53 = scmp.eq.s32.totalorder %s15, 1
      %p54 = por %p52, %p53
      %p56 = scmp.ne.s32.totalorder %s41, %s55
      %p57 = scmp.eq.s32.totalorder %s15, 0
      %p58 = por %p56, %p57
      %p59 = scmp.le.s32.totalorder 1, %s9
      %p60 = scmp.lt.s32.totalorder %s9, 3
      %p61 = pnand %p59, %p60
      %p62 = pneg %p61
      // Predicated region
      $region9: #{tpu_custom_call.1} parent=5 // pred_check
        _
      $region10: #{tpu_custom_call.1} parent=5 // pred_check_branch
        %64 = sbr.rel (%p61) target = $region12
      $region11: #{tpu_custom_call.1} parent=5 // pred_region
        %s65 = ssub.s32 %s9, 1
        // Predicated region
        $region13: #{tpu_custom_call.1} parent=11 // pred_check
          %p66 = pneg %p30
        $region14: #{tpu_custom_call.1} parent=11 // pred_check_branch
          %68 = sbr.rel (%p66) target = $region16
        $region15: #{tpu_custom_call.1} parent=11 // pred_region
          %70 = vsyncadd [#allocation3], 0
          %s72 = sshll.u32 %s0, 4
          %s73 = int_to_ptr.hbm [resolvable:$true] %s72
          %s74 = sshll.u32 [#allocation2], 4
          %s75 = int_to_ptr.vmem [resolvable:$true] %s74
          %77 = dma.hbm_to_vmem [thread:$0]  %s73, 128, %s75, [#allocation3]
        $region16: #{tpu_custom_call.1} parent=11 // pred_fallthru
          _
      $region12: #{tpu_custom_call.1} parent=5 // pred_fallthru
        _
      %p78 = scmp.lt.s32.totalorder %s9, 2
      // Predicated region
      $region17: #{tpu_custom_call.1} parent=5 // pred_check
        %p79 = pneg %p78
      $region18: #{tpu_custom_call.1} parent=5 // pred_check_branch
        %81 = sbr.rel (%p79) target = $region20
      $region19: #{tpu_custom_call.1} parent=5 // pred_region
        _
      $region20: #{tpu_custom_call.1} parent=5 // pred_fallthru
        _
      %p82 = scmp.le.s32.totalorder 1, %s9
      %p83 = scmp.lt.s32.totalorder %s9, 3
      %p84 = pnand %p82, %p83
      %p85 = pneg %p84
      // Predicated region
      $region21: #{tpu_custom_call.1} parent=5 // pred_check
        _
      $region22: #{tpu_custom_call.1} parent=5 // pred_check_branch
        %87 = sbr.rel (%p84) target = $region24
      $region23: #{tpu_custom_call.1} parent=5 // pred_region
        %s88 = ssub.s32 %s9, 1
        // Predicated region
        $region25: #{tpu_custom_call.1} parent=23 // pred_check
          %p89 = pneg %p30
        $region26: #{tpu_custom_call.1} parent=23 // pred_check_branch
          %91 = sbr.rel (%p89) target = $region28
        $region27: #{tpu_custom_call.1} parent=23 // pred_region
          %93 = dma.done [#allocation3], 128
        $region28: #{tpu_custom_call.1} parent=23 // pred_fallthru
          _
        %p94 = pneg %p30
        %p95 = pneg %p27
        %p96 = pneg %p51
        %p97 = pneg %p48
        %v98 = vld [vmem:[#allocation2] sm:$0xff]
        %99 = vst [vmem:[#allocation5] sm:$0xff] %v98
        // Predicated region
        $region29: #{tpu_custom_call.1} parent=23 // pred_check
          %p100 = pneg %p48
        $region30: #{tpu_custom_call.1} parent=23 // pred_check_branch
          %102 = sbr.rel (%p100) target = $region32
        $region31: #{tpu_custom_call.1} parent=23 // pred_region
          %104 = vsyncadd [#allocation4], 0
          %s106 = sshll.u32 [#allocation5], 4
          %s107 = int_to_ptr.vmem [resolvable:$true] %s106
          %s108 = sshll.u32 %s1, 4
          %s109 = int_to_ptr.hbm [resolvable:$true] %s108
          %111 = dma.vmem_to_hbm [thread:$0]  %s107, 128, %s109, [#allocation4]
        $region32: #{tpu_custom_call.1} parent=23 // pred_fallthru
          _
        // Predicated region
        $region33: #{tpu_custom_call.1} parent=23 // pred_check
          %p112 = pneg %p48
        $region34: #{tpu_custom_call.1} parent=23 // pred_check_branch
          %114 = sbr.rel (%p112) target = $region36
        $region35: #{tpu_custom_call.1} parent=23 // pred_region
          %116 = dma.done [#allocation4], 128
        $region36: #{tpu_custom_call.1} parent=23 // pred_fallthru
          _
      $region24: #{tpu_custom_call.1} parent=5 // pred_fallthru
        _
      %p117 = scmp.le.s32.totalorder 2, %s9
      // Predicated region
      $region37: #{tpu_custom_call.1} parent=5 // pred_check
        %p118 = pneg %p117
      $region38: #{tpu_custom_call.1} parent=5 // pred_check_branch
        %120 = sbr.rel (%p118) target = $region40
      $region39: #{tpu_custom_call.1} parent=5 // pred_region
        %s121 = ssub.s32 %s9, 2
      $region40: #{tpu_custom_call.1} parent=5 // pred_fallthru
        _
    $region6: #{tpu_custom_call.1} parent=1 // loop_footer
      %s13 = sadd.s32 1, %s9
    $region7: #{tpu_custom_call.1} parent=1 // loop_footer_branch
      %8 = sbr.rel target = $region3
    $region8: #{tpu_custom_call.1} parent=1 // loop_exit
      _
    %122 = vsyncpa [#allocation3], 1
    %s123 = scalar_lea.sflag [#allocation3], 1
    %124 = vsyncpa %s123, 1
    %125 = vsyncpa [#allocation4], 1
    %s126 = scalar_lea.sflag [#allocation4], 1
    %127 = vsyncpa %s126, 1

// kernel: net_forward.10
$region0: #{net_forward.10}
  #allocation0 [shape = 'u32[]', space=smem, size = 0x4, offset = 0x4, fixed_abs, tag = 'smem constant byte address 0x4 - core index']
  #allocation1 [shape = 'u32[72,128]{1,0:T(1,128)}', space=vmem, size = 0x9000, scoped, tag = 'internal scratch']
  %s0 = inlined_call_operand.vmem [shape: f32[16,128], index: 0, kind: input, shape index: {}]
  %s1 = inlined_call_operand.vmem [shape: f32[1,128], index: 1, kind: input, shape index: {}]
  %s2 = inlined_call_operand.vmem [shape: f32[1,128], index: 2, kind: input, shape index: {}]
  %s3 = inlined_call_operand.vmem [shape: bf16[16,128], index: 3, kind: output, shape index: {}]
  %s4 = sld [smem:[#allocation0]]
  $region22: #{net_forward.10} parent=0
    _
  %s6 = ssub.s32 1, %s4
  %s7 = scalar_select 0, %s6, %s4
  // Predicated region
  $region2: #{net_forward.10} parent=0 // pred_check
    _
  $region3: #{net_forward.10} parent=0 // pred_check_branch
    %9 = sbr.rel (0) target = $region5
  $region4: #{net_forward.10} parent=0 // pred_region
    _
  $region5: #{net_forward.10} parent=0 // pred_fallthru
    _
  // Predicated region
  $region6: #{net_forward.10} parent=0 // pred_check
    _
  $region7: #{net_forward.10} parent=0 // pred_check_branch
    %11 = sbr.rel (0) target = $region9
  $region8: #{net_forward.10} parent=0 // pred_region
    _
  $region9: #{net_forward.10} parent=0 // pred_fallthru
    _
  // Predicated region
  $region10: #{net_forward.10} parent=0 // pred_check
    _
  $region11: #{net_forward.10} parent=0 // pred_check_branch
    %13 = sbr.rel (0) target = $region13
  $region12: #{net_forward.10} parent=0 // pred_region
    _
  $region13: #{net_forward.10} parent=0 // pred_fallthru
    _
  %v14 = vld [vmem:[%s0] sm:$0xff]
  %v15 = vld [vmem:[%s0 + $0x8] sm:$0xff]
  %16 = vadd.xlane.f32.xlu0 %v14
  %v17 = vpop.xlane.xlu0 %16
  %18 = vadd.xlane.f32.xlu0 %v15
  %v19 = vpop.xlane.xlu0 %18
  %v20 = vrcp.pop 128.0
  %v21 = vmul.f32 128.0, %v20
  %v22 = vsub.f32 1.0, %v21
  %v23 = vmul.f32 %v20, %v22
  %v24 = vadd.f32 %v20, %v23
  %vm25 = vweird.f32 %v20
  %v26 = vsel %vm25, %v20, %v24
  %v27 = vmul.f32 %v17, %v26
  %v28 = vmul.f32 %v19, %v26
  %v29 = vsub.f32 %v14, %v27
  %v30 = vsub.f32 %v15, %v28
  %v31 = vmul.f32 %v29, %v29
  %v32 = vmul.f32 %v30, %v30
  %33 = vadd.xlane.f32.xlu0 %v31
  %v34 = vpop.xlane.xlu0 %33
  %35 = vadd.xlane.f32.xlu0 %v32
  %v36 = vpop.xlane.xlu0 %35
  %v37 = vmul.f32 %v34, %v26
  %v38 = vmul.f32 %v36, %v26
  %v39 = vadd.f32 %v37, 1e-12
  %v40 = vadd.f32 %v38, 1e-12
  %v41 = vrsqrt.pop %v39
  %v42 = vmul.f32 %v41, %v39
  %v43 = vmul.f32 %v42, %v41
  %v44 = vmul.f32 0.5, %v43
  %v45 = vsub.f32 1.5, %v44
  %v46 = vmul.f32 %v41, %v45
  %vm47 = vweird.f32 %v39
  %vm48 = vweird.f32 %v41
  %vm49 = vmor %vm47, %vm48
  %v50 = vsel %vm49, %v41, %v46
  %v51 = vrsqrt.pop %v40
  %v52 = vmul.f32 %v51, %v40
  %v53 = vmul.f32 %v52, %v51
  %v54 = vmul.f32 0.5, %v53
  %v55 = vsub.f32 1.5, %v54
  %v56 = vmul.f32 %v51, %v55
  %vm57 = vweird.f32 %v40
  %vm58 = vweird.f32 %v51
  %vm59 = vmor %vm57, %vm58
  %v60 = vsel %vm59, %v51, %v56
  %v61 = vmul.f32 %v29, %v50
  %v62 = vmul.f32 %v30, %v60
  %v63 = vld [vmem:[%s1] sm:$0x1]
  %v65 = vperm.slane %v63, 0
  %v67 = vmul.f32 %v61, %v65
  %v68 = vmul.f32 %v62, %v65
  %v69 = vld [vmem:[%s2] sm:$0x1]
  %v71 = vperm.slane %v69, 0
  %v73 = vadd.f32 %v67, %v71
  %v74 = vadd.f32 %v68, %v71
  %v75 = vpack.c.bf16 %v73, %v73
  %v76 = vpack.c.bf16 %v74, %v74
  %77 = vst [vmem:[%s3] sm:$0xf] %v75
  %78 = vst [vmem:[%s3 + $0x4] sm:$0xf] %v76
  // Predicated region
  $region14: #{net_forward.10} parent=0 // pred_check
    _
  $region15: #{net_forward.10} parent=0 // pred_check_branch
    %80 = sbr.rel (0) target = $region17
  $region16: #{net_forward.10} parent=0 // pred_region
    _
  $region17: #{net_forward.10} parent=0 // pred_fallthru
    _
  // Predicated region
  $region18: #{net_forward.10} parent=0 // pred_check
    _
  $region19: #{net_forward.10} parent=0 // pred_check_branch
    %82 = sbr.rel (0) target = $region21
  $region20: #{net_forward.10} parent=0 // pred_region
    _
  $region21: #{net_forward.10} parent=0 // pred_fallthru
    _

// kernel: net_forward.11
$region0: #{net_forward.11}
  #allocation0 [shape = 'u32[]', space=smem, size = 0x4, offset = 0x4, fixed_abs, tag = 'smem constant byte address 0x4 - core index']
  #allocation1 [shape = 'u32[72,128]{1,0:T(1,128)}', space=vmem, size = 0x9000, scoped, tag = 'internal scratch']
  %s0 = inlined_call_operand.vmem [shape: bf16[16,128], index: 0, kind: input, shape index: {}]
  %s1 = inlined_call_operand.hbm [shape: bf16[128,384], index: 1, kind: input, shape index: {}]
  %s2 = inlined_call_operand.vmem [shape: f32[1,384], index: 2, kind: input, shape index: {}]
  %s3 = inlined_call_operand.vmem [shape: bf16[16,128], index: 3, kind: output, shape index: {}]
  %s4 = sld [smem:[#allocation0]]
  $region49: #{net_forward.11} parent=0
    _
  %s6 = ssub.s32 1, %s4
  %s7 = scalar_select 0, %s6, %s4
  $region1: #{net_forward.11} parent=0
    #allocation2 [shape = 'u8[98304]{0}', space=vmem, size = 0x18000, scoped, tag = 'input window, operand 1, single buffered']
    #allocation3 [shape = 's32[2]{0}', space=sflag, size = 0x8, scoped, tag = 'scoped memory for net_forward.11']
    %8 = vsyncpa [#allocation3], 0
    loop: start=0, step=1, limit=4
    $region2: #{net_forward.11} parent=1 // loop_pre_header
      _
    $region3: #{net_forward.11} parent=1 // loop_header
      %s10 = sphi 0, %s14
      %p11 = scmp.ge.s32.totalorder %s10, 4
      %s20 = sphi 0, %s22
      %s23 = sphi 0, %s20
      %s24 = sphi 0, %s23
      %s40 = sphi 0, %s24
      %s44 = sphi 0, %s44
      %s46 = sphi 0, %s44
      %s47 = sphi 0, %s46
      %s61 = sphi 0, %s47
      %s65 = sphi 0, %s65
      %s67 = sphi 0, %s65
      %s68 = sphi 0, %s67
      %s82 = sphi 0, %s68
      %s88 = sphi 0, %s90
      %s91 = sphi 0, %s88
      %s92 = sphi 0, %s91
      %s108 = sphi 0, %s92
    $region4: #{net_forward.11} parent=1 // loop_header_branch
      %13 = sbr.rel (%p11) target = $region8
    $region5: #{net_forward.11} parent=1 // loop_body
      %s15 = ssub.s32 %s10, 1
      %s16 = ssub.s32 %s10, 2
      %s17 = sadd.s32 %s10, 1
      %s18 = ssub.s32 %s10, %s17
      %p19 = scmp.eq.s32.totalorder %s18, 0
      %s21 = sadd.s32 %s20, 1
      %s22 = scalar_select %p19, %s20, %s21
      %p25 = pneg %p19
      %p26 = scmp.eq.s32.totalorder %s10, 1
      %p27 = por %p25, %p26
      %p28 = scmp.ne.s32.totalorder %s20, %s23
      %p29 = scmp.eq.s32.totalorder %s10, 0
      %p30 = por %p28, %p29
      %p31 = scmp.ne.s32.totalorder %s20, %s23
      %p32 = scmp.eq.s32.totalorder %s15, 1
      %p33 = por %p31, %p32
      %p34 = scmp.ne.s32.totalorder %s23, %s24
      %p35 = scmp.eq.s32.totalorder %s15, 0
      %p36 = por %p34, %p35
      %p37 = scmp.ne.s32.totalorder %s23, %s24
      %p38 = scmp.eq.s32.totalorder %s16, 1
      %p39 = por %p37, %p38
      %p41 = scmp.ne.s32.totalorder %s24, %s40
      %p42 = scmp.eq.s32.totalorder %s16, 0
      %p43 = por %p41, %p42
      %s45 = sadd.s32 %s44, 1
      %p48 = scmp.eq.s32.totalorder %s10, 1
      %p49 = scmp.ne.s32.totalorder %s44, %s46
      %p50 = scmp.eq.s32.totalorder %s10, 0
      %p51 = por %p49, %p50
      %p52 = scmp.ne.s32.totalorder %s44, %s46
      %p53 = scmp.eq.s32.totalorder %s15, 1
      %p54 = por %p52, %p53
      %p55 = scmp.ne.s32.totalorder %s46, %s47
      %p56 = scmp.eq.s32.totalorder %s15, 0
      %p57 = por %p55, %p56
      %p58 = scmp.ne.s32.totalorder %s46, %s47
      %p59 = scmp.eq.s32.totalorder %s16, 1
      %p60 = por %p58, %p59
      %p62 = scmp.ne.s32.totalorder %s47, %s61
      %p63 = scmp.eq.s32.totalorder %s16, 0
      %p64 = por %p62, %p63
      %s66 = sadd.s32 %s65, 1
      %p69 = scmp.eq.s32.totalorder %s10, 1
      %p70 = scmp.ne.s32.totalorder %s65, %s67
      %p71 = scmp.eq.s32.totalorder %s10, 0
      %p72 = por %p70, %p71
      %p73 = scmp.ne.s32.totalorder %s65, %s67
      %p74 = scmp.eq.s32.totalorder %s15, 1
      %p75 = por %p73, %p74
      %p76 = scmp.ne.s32.totalorder %s67, %s68
      %p77 = scmp.eq.s32.totalorder %s15, 0
      %p78 = por %p76, %p77
      %p79 = scmp.ne.s32.totalorder %s67, %s68
      %p80 = scmp.eq.s32.totalorder %s16, 1
      %p81 = por %p79, %p80
      %p83 = scmp.ne.s32.totalorder %s68, %s82
      %p84 = scmp.eq.s32.totalorder %s16, 0
      %p85 = por %p83, %p84
      %s86 = ssub.s32 %s10, %s17
      %p87 = scmp.eq.s32.totalorder %s86, 0
      %s89 = sadd.s32 %s88, 1
      %s90 = scalar_select %p87, %s88, %s89
      %p93 = pneg %p87
      %p94 = scmp.eq.s32.totalorder %s10, 1
      %p95 = por %p93, %p94
      %p96 = scmp.ne.s32.totalorder %s88, %s91
      %p97 = scmp.eq.s32.totalorder %s10, 0
      %p98 = por %p96, %p97
      %p99 = scmp.ne.s32.totalorder %s88, %s91
      %p100 = scmp.eq.s32.totalorder %s15, 1
      %p101 = por %p99, %p100
      %p102 = scmp.ne.s32.totalorder %s91, %s92
      %p103 = scmp.eq.s32.totalorder %s15, 0
      %p104 = por %p102, %p103
      %p105 = scmp.ne.s32.totalorder %s91, %s92
      %p106 = scmp.eq.s32.totalorder %s16, 1
      %p107 = por %p105, %p106
      %p109 = scmp.ne.s32.totalorder %s92, %s108
      %p110 = scmp.eq.s32.totalorder %s16, 0
      %p111 = por %p109, %p110
      %p112 = scmp.le.s32.totalorder 1, %s10
      %p113 = scmp.lt.s32.totalorder %s10, 3
      %p114 = pnand %p112, %p113
      %p115 = pneg %p114
      // Predicated region
      $region9: #{net_forward.11} parent=5 // pred_check
        _
      $region10: #{net_forward.11} parent=5 // pred_check_branch
        %117 = sbr.rel (%p114) target = $region12
      $region11: #{net_forward.11} parent=5 // pred_region
        %s118 = ssub.s32 %s10, 1
        // Predicated region
        $region13: #{net_forward.11} parent=11 // pred_check
          %p119 = pneg %p57
        $region14: #{net_forward.11} parent=11 // pred_check_branch
          %121 = sbr.rel (%p119) target = $region16
        $region15: #{net_forward.11} parent=11 // pred_region
          %123 = vsyncadd [#allocation3], 0
          %s124 = sshll.u32 %s1, 4
          %s125 = int_to_ptr.hbm [resolvable:$true] %s124
          %s126 = sshll.u32 [#allocation2], 4
          %s127 = int_to_ptr.vmem [resolvable:$true] %s126
          %132 = dma.hbm_to_vmem [thread:$0]  %s125, 3072, %s127, [#allocation3], 192, 192, 12
        $region16: #{net_forward.11} parent=11 // pred_fallthru
          _
        // Predicated region
        $region17: #{net_forward.11} parent=11 // pred_check
          %p133 = pneg %p78
        $region18: #{net_forward.11} parent=11 // pred_check_branch
          %135 = sbr.rel (%p133) target = $region20
        $region19: #{net_forward.11} parent=11 // pred_region
          _
        $region20: #{net_forward.11} parent=11 // pred_fallthru
          _
      $region12: #{net_forward.11} parent=5 // pred_fallthru
        _
      %p136 = scmp.lt.s32.totalorder %s10, 2
      // Predicated region
      $region21: #{net_forward.11} parent=5 // pred_check
        %p137 = pneg %p136
      $region22: #{net_forward.11} parent=5 // pred_check_branch
        %139 = sbr.rel (%p137) target = $region24
      $region23: #{net_forward.11} parent=5 // pred_region
        // Predicated region
        $region25: #{net_forward.11} parent=23 // pred_check
          %p140 = pneg %p30
        $region26: #{net_forward.11} parent=23 // pred_check_branch
          %142 = sbr.rel (%p140) target = $region28
        $region27: #{net_forward.11} parent=23 // pred_region
          %p143 = scmp.lt.s32.totalorder %s10, 1
          %s144 = scalar_select %p143, %s10, 1
          %s145 = smul.addr %s144, 4
          %s146 = scalar_lea.vmem %s0, %s145
        $region28: #{net_forward.11} parent=23 // pred_fallthru
          _
      $region24: #{net_forward.11} parent=5 // pred_fallthru
        _
      %p147 = scmp.le.s32.totalorder 1, %s10
      %p148 = scmp.lt.s32.totalorder %s10, 3
      %p149 = pnand %p147, %p148
      %p150 = pneg %p149
      // Predicated region
      $region29: #{net_forward.11} parent=5 // pred_check
        _
      $region30: #{net_forward.11} parent=5 // pred_check_branch
        %152 = sbr.rel (%p149) target = $region32
      $region31: #{net_forward.11} parent=5 // pred_region
        %s153 = ssub.s32 %s10, 1
        // Predicated region
        $region33: #{net_forward.11} parent=31 // pred_check
          %p154 = pneg %p57
        $region34: #{net_forward.11} parent=31 // pred_check_branch
          %156 = sbr.rel (%p154) target = $region36
        $region35: #{net_forward.11} parent=31 // pred_region
          %158 = dma.done [#allocation3], 3072
        $region36: #{net_forward.11} parent=31 // pred_fallthru
          _
        %p159 = scmp.lt.s32.totalorder %s15, 1
        %s160 = scalar_select %p159, %s15, 1
        %s161 = smul.addr %s160, 4
        %s162 = scalar_lea.vmem %s0, %s161
        %p163 = pneg %p36
        %p164 = pneg %p33
        %p165 = pneg %p57
        %p166 = pneg %p54
        %p167 = pneg %p78
        %p168 = pneg %p75
        %p169 = pneg %p104
        %p170 = pneg %p101
        %p171 = scmp.lt.s32.totalorder %s15, 1
        %s172 = scalar_select %p171, %s15, 1
        %s173 = smul.addr %s172, 4
        %s174 = scalar_lea.vmem %s3, %s173
        %p175 = scmp.lt.s32.totalorder %s15, 1
        %s176 = scalar_select %p175, %s15, 1
        %s177 = smul.addr %s176, 4
        %s178 = scalar_lea.vmem %s0, %s177
        %p179 = scmp.lt.s32.totalorder %s15, 1
        %s180 = scalar_select %p179, %s15, 1
        %s181 = smul.addr %s180, 4
        %s182 = scalar_lea.vmem %s3, %s181
        %v184 = vld [vmem:[%s178] sm:$0xf]
        %v185 = vld [vmem:[#allocation2] sm:$0xff]
        %v186 = vld [vmem:[#allocation2 + $0x8] sm:$0xf]
        %v187 = vld [vmem:[#allocation2 + $0xc] sm:$0xff]
        %v188 = vld [vmem:[#allocation2 + $0x14] sm:$0xf]
        %v189 = vld [vmem:[#allocation2 + $0x18] sm:$0xff]
        %v190 = vld [vmem:[#allocation2 + $0x20] sm:$0xf]
        %v191 = vld [vmem:[#allocation2 + $0x24] sm:$0xff]
        %v192 = vld [vmem:[#allocation2 + $0x2c] sm:$0xf]
        %v193 = vld [vmem:[#allocation2 + $0x30] sm:$0xff]
        %v194 = vld [vmem:[#allocation2 + $0x38] sm:$0xf]
        %v195 = vld [vmem:[#allocation2 + $0x3c] sm:$0xff]
        %v196 = vld [vmem:[#allocation2 + $0x44] sm:$0xf]
        %v197 = vld [vmem:[#allocation2 + $0x48] sm:$0xff]
        %v198 = vld [vmem:[#allocation2 + $0x50] sm:$0xf]
        %v199 = vld [vmem:[#allocation2 + $0x54] sm:$0xff]
        %v200 = vld [vmem:[#allocation2 + $0x5c] sm:$0xf]
        %v201 = vld [vmem:[#allocation2 + $0x60] sm:$0xff]
        %v202 = vld [vmem:[#allocation2 + $0x68] sm:$0xf]
        %v203 = vld [vmem:[#allocation2 + $0x6c] sm:$0xff]
        %v204 = vld [vmem:[#allocation2 + $0x74] sm:$0xf]
        %v205 = vld [vmem:[#allocation2 + $0x78] sm:$0xff]
        %v206 = vld [vmem:[#allocation2 + $0x80] sm:$0xf]
        %v207 = vld [vmem:[#allocation2 + $0x84] sm:$0xff]
        %v208 = vld [vmem:[#allocation2 + $0x8c] sm:$0xf]
        %v209 = vld [vmem:[#allocation2 + $0x90] sm:$0xff]
        %v210 = vld [vmem:[#allocation2 + $0x98] sm:$0xf]
        %v211 = vld [vmem:[#allocation2 + $0x9c] sm:$0xff]
        %v212 = vld [vmem:[#allocation2 + $0xa4] sm:$0xf]
        %v213 = vld [vmem:[#allocation2 + $0xa8] sm:$0xff]
        %v214 = vld [vmem:[#allocation2 + $0xb0] sm:$0xf]
        %v215 = vld [vmem:[#allocation2 + $0xb4] sm:$0xff]
        %v216 = vld [vmem:[#allocation2 + $0xbc] sm:$0xf]
        %v217 = vld [vmem:[%s2] sm:$0x7]
        %v219 = vperm.slane %v217, 0
        %v220 = vperm.slane %v217, 1
        %v221 = vperm.slane %v217, 2
        %v257 = vunpack.c.l.b16 %v185
        %v258 = vunpack.c.h.b16 %v185
        %v259 = vunpack.c.l.b16 %v186
        %v260 = vunpack.c.l.b16 %v187
        %v261 = vunpack.c.h.b16 %v187
        %v262 = vunpack.c.l.b16 %v188
        %v263 = vunpack.c.l.b16 %v189
        %v264 = vunpack.c.h.b16 %v189
        %v265 = vunpack.c.l.b16 %v190
        %v266 = vunpack.c.l.b16 %v191
        %v267 = vunpack.c.h.b16 %v191
        %v268 = vunpack.c.l.b16 %v192
        %v269 = vunpack.c.l.b16 %v193
        %v270 = vunpack.c.h.b16 %v193
        %v271 = vunpack.c.l.b16 %v194
        %v272 = vunpack.c.l.b16 %v195
        %v273 = vunpack.c.h.b16 %v195
        %v274 = vunpack.c.l.b16 %v196
        %v275 = vunpack.c.l.b16 %v197
        %v276 = vunpack.c.h.b16 %v197
        %v277 = vunpack.c.l.b16 %v198
        %v278 = vunpack.c.l.b16 %v199
        %v279 = vunpack.c.h.b16 %v199
        %v280 = vunpack.c.l.b16 %v200
        %v281 = vunpack.c.l.b16 %v201
        %v282 = vunpack.c.h.b16 %v201
        %v283 = vunpack.c.l.b16 %v202
        %v284 = vunpack.c.l.b16 %v203
        %v285 = vunpack.c.h.b16 %v203
        %v286 = vunpack.c.l.b16 %v204
        %v287 = vunpack.c.l.b16 %v205
        %v288 = vunpack.c.h.b16 %v205
        %v289 = vunpack.c.l.b16 %v206
        %v290 = vunpack.c.l.b16 %v207
        %v291 = vunpack.c.h.b16 %v207
        %v292 = vunpack.c.l.b16 %v208
        %v293 = vunpack.c.l.b16 %v209
        %v294 = vunpack.c.h.b16 %v209
        %v295 = vunpack.c.l.b16 %v210
        %v296 = vunpack.c.l.b16 %v211
        %v297 = vunpack.c.h.b16 %v211
        %v298 = vunpack.c.l.b16 %v212
        %v299 = vunpack.c.l.b16 %v213
        %v300 = vunpack.c.h.b16 %v213
        %v301 = vunpack.c.l.b16 %v214
        %v302 = vunpack.c.l.b16 %v215
        %v303 = vunpack.c.h.b16 %v215
        %v304 = vunpack.c.l.b16 %v216
        %v305 = vpack.c.b16 %v260, %v257
        %v306 = vpack.c.b16 %v261, %v258
        %v307 = vpack.c.b16 %v262, %v259
        %v308 = vpack.c.b16 %v266, %v263
        %v309 = vpack.c.b16 %v267, %v264
        %v310 = vpack.c.b16 %v268, %v265
        %v311 = vpack.c.b16 %v272, %v269
        %v312 = vpack.c.b16 %v273, %v270
        %v313 = vpack.c.b16 %v274, %v271
        %v314 = vpack.c.b16 %v278, %v275
        %v315 = vpack.c.b16 %v279, %v276
        %v316 = vpack.c.b16 %v280, %v277
        %v317 = vpack.c.b16 %v284, %v281
        %v318 = vpack.c.b16 %v285, %v282
        %v319 = vpack.c.b16 %v286, %v283
        %v320 = vpack.c.b16 %v290, %v287
        %v321 = vpack.c.b16 %v291, %v288
        %v322 = vpack.c.b16 %v292, %v289
        %v323 = vpack.c.b16 %v296, %v293
        %v324 = vpack.c.b16 %v297, %v294
        %v325 = vpack.c.b16 %v298, %v295
        %v326 = vpack.c.b16 %v302, %v299
        %v327 = vpack.c.b16 %v303, %v300
        %v328 = vpack.c.b16 %v304, %v301
        %353 = vmatpush.bf16.msra.mxu0 %v326
        %354 = vmatpush.bf16.msra.mxu0 %v323
        %355 = vmatpush.bf16.msra.mxu0 %v320
        %356 = vmatpush.bf16.msra.mxu0 %v317
        %357 = vmatpush.bf16.msra.mxu0 %v314
        %358 = vmatpush.bf16.msra.mxu0 %v311
        %359 = vmatpush.bf16.msra.mxu0 %v308
        %360 = vmatpush.bf16.msra.mxu0 %v305
        %361 = vmatmul.bf16.gmra.mxu0 %v184
        %v362 = vpop.f32.mrf.mxu0
        %v363 = vadd.f32 %v219, %v362
        %v364 = vpop.f32.mrf.mxu0
        %365 = vdwg.mxu0
        %366 = vmatpush.bf16.msra.mxu0 %v327
        %367 = vmatpush.bf16.msra.mxu0 %v324
        %368 = vmatpush.bf16.msra.mxu0 %v321
        %369 = vmatpush.bf16.msra.mxu0 %v318
        %370 = vmatpush.bf16.msra.mxu0 %v315
        %371 = vmatpush.bf16.msra.mxu0 %v312
        %372 = vmatpush.bf16.msra.mxu0 %v309
        %373 = vmatpush.bf16.msra.mxu0 %v306
        %374 = vmatmul.bf16.gmra.mxu0 %v184
        %v375 = vpop.f32.mrf.mxu0
        %v376 = vadd.f32 %v220, %v375
        %v377 = vpop.f32.mrf.mxu0
        %378 = vdwg.mxu0
        %379 = vmatpush.bf16.msra.mxu0 %v328
        %380 = vmatpush.bf16.msra.mxu0 %v325
        %381 = vmatpush.bf16.msra.mxu0 %v322
        %382 = vmatpush.bf16.msra.mxu0 %v319
        %383 = vmatpush.bf16.msra.mxu0 %v316
        %384 = vmatpush.bf16.msra.mxu0 %v313
        %385 = vmatpush.bf16.msra.mxu0 %v310
        %386 = vmatpush.bf16.msra.mxu0 %v307
        %387 = vmatmul.bf16.gmra.mxu0 %v184
        %v388 = vpop.f32.mrf.mxu0
        %v389 = vadd.f32 %v221, %v388
        %v390 = vpop.f32.mrf.mxu0
        %391 = vdwg.mxu0
        %v392 = vmul.f32 %v363, 0.125
        %v393 = vpack.c.bf16 %v392, %v392
        %v394 = vpack.c.bf16 %v376, %v376
        %v395 = vpack.c.bf16 %v389, %v389
        %vm396 = vcmask 523264
        %v398 = vsel %vm396, %v393, 0
        %v401 = vsel %vm396, %v394, 0
        %403 = vmatpush.bf16.xpose.msra.mxu0 0
        %404 = vmatpush.bf16.xpose.msra.mxu0 0
        %405 = vmatpush.bf16.xpose.msra.mxu0 0
        %406 = vmatpush.bf16.xpose.msra.mxu0 0
        %407 = vmatpush.bf16.xpose.msra.mxu0 0
        %408 = vmatpush.bf16.xpose.msra.mxu0 0
        %409 = vmatpush.bf16.xpose.msra.mxu0 0
        %410 = vmatpush.bf16.xpose.msra.mxu0 %v401
        %411 = vmatmul.bf16.gmra.mxu0 %v398
        %v412 = vpop.f32.mrf.mxu0
        %v413 = vadd.f32 0.0, %v412
        %v414 = vpop.f32.mrf.mxu0
        %415 = vdwg.mxu0
        %vm416 = vcmask 64512
        %v417 = vsel %vm416, %v413, -inf
        %418 = vmax.xlane.f32.xlu0 %v417
        %v419 = vpop.xlane.xlu0 %418
        %v420 = vsub.f32 %v413, %v419
        %v421 = vmul.f32 %v420, 1.442695
        %v422 = vpow.pop %v421
        %v423 = vsel %vm416, %v422, 0.0
        %424 = vadd.xlane.f32.xlu0 %v423
        %v425 = vpop.xlane.xlu0 %424
        %v426 = vrcp.pop %v425
        %v427 = vmul.f32 %v422, %v426
        %v428 = vpack.c.bf16 %v427, %v427
        %v430 = vsel %vm416, %v428, 0
        %vm432 = vcmask 1043456
        %v434 = vsel %vm432, %v395, 0
        %436 = vmatpush.bf16.msra.mxu0 0
        %437 = vmatpush.bf16.msra.mxu0 0
        %438 = vmatpush.bf16.msra.mxu0 0
        %439 = vmatpush.bf16.msra.mxu0 0
        %440 = vmatpush.bf16.msra.mxu0 0
        %441 = vmatpush.bf16.msra.mxu0 0
        %442 = vmatpush.bf16.msra.mxu0 0
        %443 = vmatpush.bf16.msra.mxu0 %v434
        %444 = vmatmul.bf16.gmra.mxu0 %v430
        %v445 = vpop.f32.mrf.mxu0
        %v446 = vadd.f32 0.0, %v445
        %v447 = vpop.f32.mrf.mxu0
        %448 = vdwg.mxu0
        %450 = vrot.lane.b32.xlu0 %v393, 64
        %v451 = vpop.permute.xlu0 %450
        %453 = vrot.lane.b32.xlu0 %v394, 64
        %v454 = vpop.permute.xlu0 %453
        %v456 = vsel %vm396, %v451, 0
        %v459 = vsel %vm396, %v454, 0
        %461 = vmatpush.bf16.xpose.msra.mxu0 0
        %462 = vmatpush.bf16.xpose.msra.mxu0 0
        %463 = vmatpush.bf16.xpose.msra.mxu0 0
        %464 = vmatpush.bf16.xpose.msra.mxu0 0
        %465 = vmatpush.bf16.xpose.msra.mxu0 0
        %466 = vmatpush.bf16.xpose.msra.mxu0 0
        %467 = vmatpush.bf16.xpose.msra.mxu0 0
        %468 = vmatpush.bf16.xpose.msra.mxu0 %v459
        %469 = vmatmul.bf16.gmra.mxu0 %v456
        %v470 = vpop.f32.mrf.mxu0
        %v471 = vadd.f32 0.0, %v470
        %v472 = vpop.f32.mrf.mxu0
        %473 = vdwg.mxu0
        %v474 = vsel %vm416, %v471, -inf
        %475 = vmax.xlane.f32.xlu0 %v474
        %v476 = vpop.xlane.xlu0 %475
        %v477 = vsub.f32 %v471, %v476
        %v478 = vmul.f32 %v477, 1.442695
        %v479 = vpow.pop %v478
        %v480 = vsel %vm416, %v479, 0.0
        %481 = vadd.xlane.f32.xlu0 %v480
        %v482 = vpop.xlane.xlu0 %481
        %v483 = vrcp.pop %v482
        %v484 = vmul.f32 %v479, %v483
        %v485 = vpack.c.bf16 %v484, %v484
        %487 = vrot.lane.b32.xlu0 %v395, 64
        %v488 = vpop.permute.xlu0 %487
        %v490 = vsel %vm416, %v485, 0
        %v493 = vsel %vm432, %v488, 0
        %495 = vmatpush.bf16.msra.mxu0 0
        %496 = vmatpush.bf16.msra.mxu0 0
        %497 = vmatpush.bf16.msra.mxu0 0
        %498 = vmatpush.bf16.msra.mxu0 0
        %499 = vmatpush.bf16.msra.mxu0 0
        %500 = vmatpush.bf16.msra.mxu0 0
        %501 = vmatpush.bf16.msra.mxu0 0
        %502 = vmatpush.bf16.msra.mxu0 %v493
        %503 = vmatmul.bf16.gmra.mxu0 %v490
        %v504 = vpop.f32.mrf.mxu0
        %v505 = vadd.f32 0.0, %v504
        %v506 = vpop.f32.mrf.mxu0
        %507 = vdwg.mxu0
        %509 = vrot.lane.b32.xlu0 %v505, 64
        %v510 = vpop.permute.xlu0 %509
        %v512 = vsel %vm396, %v446, %v510
        %v513 = vpack.c.bf16 %v512, %v512
        %514 = vst [vmem:[%s182] sm:$0xf] %v513
        %p515 = scmp.lt.s32.totalorder %s15, 1
        %s516 = scalar_select %p515, %s15, 1
        %s517 = smul.addr %s516, 4
        %s518 = scalar_lea.vmem %s3, %s517
        // Predicated region
        $region37: #{net_forward.11} parent=31 // pred_check
          %p519 = pneg %p101
        $region38: #{net_forward.11} parent=31 // pred_check_branch
          %521 = sbr.rel (%p519) target = $region40
        $region39: #{net_forward.11} parent=31 // pred_region
          _
        $region40: #{net_forward.11} parent=31 // pred_fallthru
          _
      $region32: #{net_forward.11} parent=5 // pred_fallthru
        _
      %p522 = scmp.le.s32.totalorder 2, %s10
      // Predicated region
      $region41: #{net_forward.11} parent=5 // pred_check
        %p523 = pneg %p522
      $region42: #{net_forward.11} parent=5 // pred_check_branch
        %525 = sbr.rel (%p523) target = $region44
      $region43: #{net_forward.11} parent=5 // pred_region
        %s526 = ssub.s32 %s10, 2
        // Predicated region
        $region45: #{net_forward.11} parent=43 // pred_check
          %p527 = pneg %p107
        $region46: #{net_forward.11} parent=43 // pred_check_branch
          %529 = sbr.rel (%p527) target = $region48
        $region47: #{net_forward.11} parent=43 // pred_region
          %p530 = scmp.lt.s32.totalorder %s16, 1
          %s531 = scalar_select %p530, %s16, 1
          %s532 = smul.addr %s531, 4
          %s533 = scalar_lea.vmem %s3, %s532
        $region48: #{net_forward.11} parent=43 // pred_fallthru
          _
      $region44: #{net_forward.11} parent=5 // pred_fallthru
        _
    $region6: #{net_forward.11} parent=1 // loop_footer
      %s14 = sadd.s32 1, %s10
    $region7: #{net_forward.11} parent=1 // loop_footer_branch
      %9 = sbr.rel target = $region3
    $region8: #{net_forward.11} parent=1 // loop_exit
      _
    %534 = vsyncpa [#allocation3], 1
    %s535 = scalar_lea.sflag [#allocation3], 1
    %536 = vsyncpa %s535, 1

// kernel: net_forward.12
$region0: #{net_forward.12}
  #allocation0 [shape = 'u32[]', space=smem, size = 0x4, offset = 0x4, fixed_abs, tag = 'smem constant byte address 0x4 - core index']
  #allocation1 [shape = 'u32[72,128]{1,0:T(1,128)}', space=vmem, size = 0x9000, scoped, tag = 'internal scratch']
  %s0 = inlined_call_operand.vmem [shape: bf16[16,128], index: 0, kind: input, shape index: {}]
  %s1 = inlined_call_operand.vmem [shape: bf16[128,128], index: 1, kind: input, shape index: {}]
  %s2 = inlined_call_operand.vmem [shape: f32[1,128], index: 2, kind: input, shape index: {}]
  %s3 = inlined_call_operand.vmem [shape: bf16[16,128], index: 3, kind: input, shape index: {}]
  %s4 = inlined_call_operand.vmem [shape: f32[1,128], index: 4, kind: input, shape index: {}]
  %s5 = inlined_call_operand.vmem [shape: f32[1,128], index: 5, kind: input, shape index: {}]
  %s6 = inlined_call_operand.vmem [shape: bf16[16,128], index: 6, kind: output, shape index: {}]
  %s7 = sld [smem:[#allocation0]]
  $region34: #{net_forward.12} parent=0
    _
  %s9 = ssub.s32 1, %s7
  %s10 = scalar_select 0, %s9, %s7
  // Predicated region
  $region2: #{net_forward.12} parent=0 // pred_check
    _
  $region3: #{net_forward.12} parent=0 // pred_check_branch
    %12 = sbr.rel (0) target = $region5
  $region4: #{net_forward.12} parent=0 // pred_region
    _
  $region5: #{net_forward.12} parent=0 // pred_fallthru
    _
  // Predicated region
  $region6: #{net_forward.12} parent=0 // pred_check
    _
  $region7: #{net_forward.12} parent=0 // pred_check_branch
    %14 = sbr.rel (0) target = $region9
  $region8: #{net_forward.12} parent=0 // pred_region
    _
  $region9: #{net_forward.12} parent=0 // pred_fallthru
    _
  // Predicated region
  $region10: #{net_forward.12} parent=0 // pred_check
    _
  $region11: #{net_forward.12} parent=0 // pred_check_branch
    %16 = sbr.rel (0) target = $region13
  $region12: #{net_forward.12} parent=0 // pred_region
    _
  $region13: #{net_forward.12} parent=0 // pred_fallthru
    _
  // Predicated region
  $region14: #{net_forward.12} parent=0 // pred_check
    _
  $region15: #{net_forward.12} parent=0 // pred_check_branch
    %18 = sbr.rel (0) target = $region17
  $region16: #{net_forward.12} parent=0 // pred_region
    _
  $region17: #{net_forward.12} parent=0 // pred_fallthru
    _
  // Predicated region
  $region18: #{net_forward.12} parent=0 // pred_check
    _
  $region19: #{net_forward.12} parent=0 // pred_check_branch
    %20 = sbr.rel (0) target = $region21
  $region20: #{net_forward.12} parent=0 // pred_region
    _
  $region21: #{net_forward.12} parent=0 // pred_fallthru
    _
  // Predicated region
  $region22: #{net_forward.12} parent=0 // pred_check
    _
  $region23: #{net_forward.12} parent=0 // pred_check_branch
    %22 = sbr.rel (0) target = $region25
  $region24: #{net_forward.12} parent=0 // pred_region
    _
  $region25: #{net_forward.12} parent=0 // pred_fallthru
    _
  %v23 = vld [vmem:[%s0] sm:$0xf]
  %v24 = vld [vmem:[%s0 + $0x4] sm:$0xf]
  %v25 = vld [vmem:[%s1] sm:$0xf]
  %v26 = vld [vmem:[%s1 + $0x4] sm:$0xf]
  %v27 = vld [vmem:[%s1 + $0x8] sm:$0xf]
  %v28 = vld [vmem:[%s1 + $0xc] sm:$0xf]
  %v29 = vld [vmem:[%s1 + $0x10] sm:$0xf]
  %v30 = vld [vmem:[%s1 + $0x14] sm:$0xf]
  %v31 = vld [vmem:[%s1 + $0x18] sm:$0xf]
  %v32 = vld [vmem:[%s1 + $0x1c] sm:$0xf]
  %v33 = vld [vmem:[%s1 + $0x20] sm:$0xf]
  %v34 = vld [vmem:[%s1 + $0x24] sm:$0xf]
  %v35 = vld [vmem:[%s1 + $0x28] sm:$0xf]
  %v36 = vld [vmem:[%s1 + $0x2c] sm:$0xf]
  %v37 = vld [vmem:[%s1 + $0x30] sm:$0xf]
  %v38 = vld [vmem:[%s1 + $0x34] sm:$0xf]
  %v39 = vld [vmem:[%s1 + $0x38] sm:$0xf]
  %v40 = vld [vmem:[%s1 + $0x3c] sm:$0xf]
  %v41 = vld [vmem:[%s2] sm:$0x1]
  %v43 = vperm.slane %v41, 0
  %v47 = vunpack.c.l.b16 %v23
  %v48 = vunpack.c.l.b16 %v24
  %v49 = vpack.c.b16 %v48, %v47
  %v67 = vunpack.c.l.b16 %v25
  %v68 = vunpack.c.l.b16 %v26
  %v69 = vunpack.c.l.b16 %v27
  %v70 = vunpack.c.l.b16 %v28
  %v71 = vunpack.c.l.b16 %v29
  %v72 = vunpack.c.l.b16 %v30
  %v73 = vunpack.c.l.b16 %v31
  %v74 = vunpack.c.l.b16 %v32
  %v75 = vunpack.c.l.b16 %v33
  %v76 = vunpack.c.l.b16 %v34
  %v77 = vunpack.c.l.b16 %v35
  %v78 = vunpack.c.l.b16 %v36
  %v79 = vunpack.c.l.b16 %v37
  %v80 = vunpack.c.l.b16 %v38
  %v81 = vunpack.c.l.b16 %v39
  %v82 = vunpack.c.l.b16 %v40
  %v83 = vpack.c.b16 %v68, %v67
  %v84 = vpack.c.b16 %v70, %v69
  %v85 = vpack.c.b16 %v72, %v71
  %v86 = vpack.c.b16 %v74, %v73
  %v87 = vpack.c.b16 %v76, %v75
  %v88 = vpack.c.b16 %v78, %v77
  %v89 = vpack.c.b16 %v80, %v79
  %v90 = vpack.c.b16 %v82, %v81
  %99 = vmatpush.bf16.msra.mxu0 %v90
  %100 = vmatpush.bf16.msra.mxu0 %v89
  %101 = vmatpush.bf16.msra.mxu0 %v88
  %102 = vmatpush.bf16.msra.mxu0 %v87
  %103 = vmatpush.bf16.msra.mxu0 %v86
  %104 = vmatpush.bf16.msra.mxu0 %v85
  %105 = vmatpush.bf16.msra.mxu0 %v84
  %106 = vmatpush.bf16.msra.mxu0 %v83
  %107 = vmatmul.bf16.gmra.mxu0 %v49
  %v108 = vpop.f32.mrf.mxu0
  %v109 = vadd.f32 %v43, %v108
  %v110 = vpop.f32.mrf.mxu0
  %v111 = vadd.f32 %v43, %v110
  %112 = vdwg.mxu0
  %v113 = vld [vmem:[%s3] sm:$0xf]
  %v114 = vld [vmem:[%s3 + $0x4] sm:$0xf]
  %v115 = vunpack.c.l.bf16 %v113
  %v116 = vunpack.c.l.bf16 %v114
  %v117 = vadd.f32 %v109, %v115
  %v118 = vadd.f32 %v111, %v116
  %119 = vadd.xlane.f32.xlu0 %v117
  %v120 = vpop.xlane.xlu0 %119
  %121 = vadd.xlane.f32.xlu0 %v118
  %v122 = vpop.xlane.xlu0 %121
  %v123 = vrcp.pop 128.0
  %v124 = vmul.f32 128.0, %v123
  %v125 = vsub.f32 1.0, %v124
  %v126 = vmul.f32 %v123, %v125
  %v127 = vadd.f32 %v123, %v126
  %vm128 = vweird.f32 %v123
  %v129 = vsel %vm128, %v123, %v127
  %v130 = vmul.f32 %v120, %v129
  %v131 = vmul.f32 %v122, %v129
  %v132 = vsub.f32 %v117, %v130
  %v133 = vsub.f32 %v118, %v131
  %v134 = vmul.f32 %v132, %v132
  %v135 = vmul.f32 %v133, %v133
  %136 = vadd.xlane.f32.xlu0 %v134
  %v137 = vpop.xlane.xlu0 %136
  %138 = vadd.xlane.f32.xlu0 %v135
  %v139 = vpop.xlane.xlu0 %138
  %v140 = vmul.f32 %v137, %v129
  %v141 = vmul.f32 %v139, %v129
  %v142 = vadd.f32 %v140, 1e-12
  %v143 = vadd.f32 %v141, 1e-12
  %v144 = vrsqrt.pop %v142
  %v145 = vmul.f32 %v144, %v142
  %v146 = vmul.f32 %v145, %v144
  %v147 = vmul.f32 0.5, %v146
  %v148 = vsub.f32 1.5, %v147
  %v149 = vmul.f32 %v144, %v148
  %vm150 = vweird.f32 %v142
  %vm151 = vweird.f32 %v144
  %vm152 = vmor %vm150, %vm151
  %v153 = vsel %vm152, %v144, %v149
  %v154 = vrsqrt.pop %v143
  %v155 = vmul.f32 %v154, %v143
  %v156 = vmul.f32 %v155, %v154
  %v157 = vmul.f32 0.5, %v156
  %v158 = vsub.f32 1.5, %v157
  %v159 = vmul.f32 %v154, %v158
  %vm160 = vweird.f32 %v143
  %vm161 = vweird.f32 %v154
  %vm162 = vmor %vm160, %vm161
  %v163 = vsel %vm162, %v154, %v159
  %v164 = vmul.f32 %v132, %v153
  %v165 = vmul.f32 %v133, %v163
  %v166 = vld [vmem:[%s4] sm:$0x1]
  %v168 = vperm.slane %v166, 0
  %v170 = vmul.f32 %v164, %v168
  %v171 = vmul.f32 %v165, %v168
  %v172 = vld [vmem:[%s5] sm:$0x1]
  %v174 = vperm.slane %v172, 0
  %v176 = vadd.f32 %v170, %v174
  %v177 = vadd.f32 %v171, %v174
  %v178 = vpack.c.bf16 %v176, %v176
  %v179 = vpack.c.bf16 %v177, %v177
  %180 = vst [vmem:[%s6] sm:$0xf] %v178
  %181 = vst [vmem:[%s6 + $0x4] sm:$0xf] %v179
  // Predicated region
  $region26: #{net_forward.12} parent=0 // pred_check
    _
  $region27: #{net_forward.12} parent=0 // pred_check_branch
    %183 = sbr.rel (0) target = $region29
  $region28: #{net_forward.12} parent=0 // pred_region
    _
  $region29: #{net_forward.12} parent=0 // pred_fallthru
    _
  // Predicated region
  $region30: #{net_forward.12} parent=0 // pred_check
    _
  $region31: #{net_forward.12} parent=0 // pred_check_branch
    %185 = sbr.rel (0) target = $region33
  $region32: #{net_forward.12} parent=0 // pred_region
    _
  $region33: #{net_forward.12} parent=0 // pred_fallthru
    _

// kernel: net_forward.13
$region0: #{net_forward.13}
  #allocation0 [shape = 'u32[]', space=smem, size = 0x4, offset = 0x4, fixed_abs, tag = 'smem constant byte address 0x4 - core index']
  #allocation1 [shape = 'u32[72,128]{1,0:T(1,128)}', space=vmem, size = 0x9000, scoped, tag = 'internal scratch']
  %s0 = inlined_call_operand.vmem [shape: bf16[16,128], index: 0, kind: input, shape index: {}]
  %s1 = inlined_call_operand.hbm [shape: bf16[128,512], index: 1, kind: input, shape index: {}]
  %s2 = inlined_call_operand.vmem [shape: f32[1,512], index: 2, kind: input, shape index: {}]
  %s3 = inlined_call_operand.vmem [shape: bf16[16,512], index: 3, kind: output, shape index: {}]
  %s4 = sld [smem:[#allocation0]]
  $region26: #{net_forward.13} parent=0
    _
  %s6 = ssub.s32 1, %s4
  %s7 = scalar_select 0, %s6, %s4
  $region1: #{net_forward.13} parent=0
    #allocation2 [shape = 'u8[131072]{0}', space=vmem, size = 0x20000, scoped, tag = 'input window, operand 1, single buffered']
    #allocation3 [shape = 's32[1]{0}', space=sflag, size = 0x4, scoped, tag = 'scoped memory for net_forward.13']
    %8 = vsyncpa [#allocation3], 0
    // Predicated region
    $region2: #{net_forward.13} parent=1 // pred_check
      _
    $region3: #{net_forward.13} parent=1 // pred_check_branch
      %10 = sbr.rel (0) target = $region5
    $region4: #{net_forward.13} parent=1 // pred_region
      _
    $region5: #{net_forward.13} parent=1 // pred_fallthru
      _
    // Predicated region
    $region6: #{net_forward.13} parent=1 // pred_check
      _
    $region7: #{net_forward.13} parent=1 // pred_check_branch
      %12 = sbr.rel (0) target = $region9
    $region8: #{net_forward.13} parent=1 // pred_region
      %14 = vsyncadd [#allocation3], 0
      %s15 = sshll.u32 %s1, 4
      %s16 = int_to_ptr.hbm [resolvable:$true] %s15
      %s17 = sshll.u32 [#allocation2], 4
      %s18 = int_to_ptr.vmem [resolvable:$true] %s17
      %23 = dma.hbm_to_vmem [thread:$0]  %s16, 4096, %s18, [#allocation3], 256, 256, 16
    $region9: #{net_forward.13} parent=1 // pred_fallthru
      _
    // Predicated region
    $region10: #{net_forward.13} parent=1 // pred_check
      _
    $region11: #{net_forward.13} parent=1 // pred_check_branch
      %25 = sbr.rel (0) target = $region13
    $region12: #{net_forward.13} parent=1 // pred_region
      _
    $region13: #{net_forward.13} parent=1 // pred_fallthru
      _
    // Predicated region
    $region14: #{net_forward.13} parent=1 // pred_check
      _
    $region15: #{net_forward.13} parent=1 // pred_check_branch
      %27 = sbr.rel (0) target = $region17
    $region16: #{net_forward.13} parent=1 // pred_region
      %29 = dma.done [#allocation3], 4096
    $region17: #{net_forward.13} parent=1 // pred_fallthru
      _
    %v30 = vld [vmem:[%s0] sm:$0xf]
    %v31 = vld [vmem:[%s0 + $0x4] sm:$0xf]
    %v32 = vld [vmem:[#allocation2] sm:$0xff]
    %v33 = vld [vmem:[#allocation2 + $0x8] sm:$0xff]
    %v34 = vld [vmem:[#allocation2 + $0x10] sm:$0xff]
    %v35 = vld [vmem:[#allocation2 + $0x18] sm:$0xff]
    %v36 = vld [vmem:[#allocation2 + $0x20] sm:$0xff]
    %v37 = vld [vmem:[#allocation2 + $0x28] sm:$0xff]
    %v38 = vld [vmem:[#allocation2 + $0x30] sm:$0xff]
    %v39 = vld [vmem:[#allocation2 + $0x38] sm:$0xff]
    %v40 = vld [vmem:[#allocation2 + $0x40] sm:$0xff]
    %v41 = vld [vmem:[#allocation2 + $0x48] sm:$0xff]
    %v42 = vld [vmem:[#allocation2 + $0x50] sm:$0xff]
    %v43 = vld [vmem:[#allocation2 + $0x58] sm:$0xff]
    %v44 = vld [vmem:[#allocation2 + $0x60] sm:$0xff]
    %v45 = vld [vmem:[#allocation2 + $0x68] sm:$0xff]
    %v46 = vld [vmem:[#allocation2 + $0x70] sm:$0xff]
    %v47 = vld [vmem:[#allocation2 + $0x78] sm:$0xff]
    %v48 = vld [vmem:[#allocation2 + $0x80] sm:$0xff]
    %v49 = vld [vmem:[#allocation2 + $0x88] sm:$0xff]
    %v50 = vld [vmem:[#allocation2 + $0x90] sm:$0xff]
    %v51 = vld [vmem:[#allocation2 + $0x98] sm:$0xff]
    %v52 = vld [vmem:[#allocation2 + $0xa0] sm:$0xff]
    %v53 = vld [vmem:[#allocation2 + $0xa8] sm:$0xff]
    %v54 = vld [vmem:[#allocation2 + $0xb0] sm:$0xff]
    %v55 = vld [vmem:[#allocation2 + $0xb8] sm:$0xff]
    %v56 = vld [vmem:[#allocation2 + $0xc0] sm:$0xff]
    %v57 = vld [vmem:[#allocation2 + $0xc8] sm:$0xff]
    %v58 = vld [vmem:[#allocation2 + $0xd0] sm:$0xff]
    %v59 = vld [vmem:[#allocation2 + $0xd8] sm:$0xff]
    %v60 = vld [vmem:[#allocation2 + $0xe0] sm:$0xff]
    %v61 = vld [vmem:[#allocation2 + $0xe8] sm:$0xff]
    %v62 = vld [vmem:[#allocation2 + $0xf0] sm:$0xff]
    %v63 = vld [vmem:[#allocation2 + $0xf8] sm:$0xff]
    %v64 = vld [vmem:[%s2] sm:$0xf]
    %v66 = vperm.slane %v64, 0
    %v67 = vperm.slane %v64, 1
    %v68 = vperm.slane %v64, 2
    %v69 = vperm.slane %v64, 3
    %v76 = vunpack.c.l.b16 %v30
    %v77 = vunpack.c.l.b16 %v31
    %v78 = vpack.c.b16 %v77, %v76
    %v112 = vunpack.c.l.b16 %v32
    %v113 = vunpack.c.h.b16 %v32
    %v114 = vunpack.c.l.b16 %v33
    %v115 = vunpack.c.h.b16 %v33
    %v116 = vunpack.c.l.b16 %v34
    %v117 = vunpack.c.h.b16 %v34
    %v118 = vunpack.c.l.b16 %v35
    %v119 = vunpack.c.h.b16 %v35
    %v120 = vunpack.c.l.b16 %v36
    %v121 = vunpack.c.h.b16 %v36
    %v122 = vunpack.c.l.b16 %v37
    %v123 = vunpack.c.h.b16 %v37
    %v124 = vunpack.c.l.b16 %v38
    %v125 = vunpack.c.h.b16 %v38
    %v126 = vunpack.c.l.b16 %v39
    %v127 = vunpack.c.h.b16 %v39
    %v128 = vunpack.c.l.b16 %v40
    %v129 = vunpack.c.h.b16 %v40
    %v130 = vunpack.c.l.b16 %v41
    %v131 = vunpack.c.h.b16 %v41
    %v132 = vunpack.c.l.b16 %v42
    %v133 = vunpack.c.h.b16 %v42
    %v134 = vunpack.c.l.b16 %v43
    %v135 = vunpack.c.h.b16 %v43
    %v136 = vunpack.c.l.b16 %v44
    %v137 = vunpack.c.h.b16 %v44
    %v138 = vunpack.c.l.b16 %v45
    %v139 = vunpack.c.h.b16 %v45
    %v140 = vunpack.c.l.b16 %v46
    %v141 = vunpack.c.h.b16 %v46
    %v142 = vunpack.c.l.b16 %v47
    %v143 = vunpack.c.h.b16 %v47
    %v144 = vunpack.c.l.b16 %v48
    %v145 = vunpack.c.h.b16 %v48
    %v146 = vunpack.c.l.b16 %v49
    %v147 = vunpack.c.h.b16 %v49
    %v148 = vunpack.c.l.b16 %v50
    %v149 = vunpack.c.h.b16 %v50
    %v150 = vunpack.c.l.b16 %v51
    %v151 = vunpack.c.h.b16 %v51
    %v152 = vunpack.c.l.b16 %v52
    %v153 = vunpack.c.h.b16 %v52
    %v154 = vunpack.c.l.b16 %v53
    %v155 = vunpack.c.h.b16 %v53
    %v156 = vunpack.c.l.b16 %v54
    %v157 = vunpack.c.h.b16 %v54
    %v158 = vunpack.c.l.b16 %v55
    %v159 = vunpack.c.h.b16 %v55
    %v160 = vunpack.c.l.b16 %v56
    %v161 = vunpack.c.h.b16 %v56
    %v162 = vunpack.c.l.b16 %v57
    %v163 = vunpack.c.h.b16 %v57
    %v164 = vunpack.c.l.b16 %v58
    %v165 = vunpack.c.h.b16 %v58
    %v166 = vunpack.c.l.b16 %v59
    %v167 = vunpack.c.h.b16 %v59
    %v168 = vunpack.c.l.b16 %v60
    %v169 = vunpack.c.h.b16 %v60
    %v170 = vunpack.c.l.b16 %v61
    %v171 = vunpack.c.h.b16 %v61
    %v172 = vunpack.c.l.b16 %v62
    %v173 = vunpack.c.h.b16 %v62
    %v174 = vunpack.c.l.b16 %v63
    %v175 = vunpack.c.h.b16 %v63
    %v176 = vpack.c.b16 %v116, %v112
    %v177 = vpack.c.b16 %v117, %v113
    %v178 = vpack.c.b16 %v118, %v114
    %v179 = vpack.c.b16 %v119, %v115
    %v180 = vpack.c.b16 %v124, %v120
    %v181 = vpack.c.b16 %v125, %v121
    %v182 = vpack.c.b16 %v126, %v122
    %v183 = vpack.c.b16 %v127, %v123
    %v184 = vpack.c.b16 %v132, %v128
    %v185 = vpack.c.b16 %v133, %v129
    %v186 = vpack.c.b16 %v134, %v130
    %v187 = vpack.c.b16 %v135, %v131
    %v188 = vpack.c.b16 %v140, %v136
    %v189 = vpack.c.b16 %v141, %v137
    %v190 = vpack.c.b16 %v142, %v138
    %v191 = vpack.c.b16 %v143, %v139
    %v192 = vpack.c.b16 %v148, %v144
    %v193 = vpack.c.b16 %v149, %v145
    %v194 = vpack.c.b16 %v150, %v146
    %v195 = vpack.c.b16 %v151, %v147
    %v196 = vpack.c.b16 %v156, %v152
    %v197 = vpack.c.b16 %v157, %v153
    %v198 = vpack.c.b16 %v158, %v154
    %v199 = vpack.c.b16 %v159, %v155
    %v200 = vpack.c.b16 %v164, %v160
    %v201 = vpack.c.b16 %v165, %v161
    %v202 = vpack.c.b16 %v166, %v162
    %v203 = vpack.c.b16 %v167, %v163
    %v204 = vpack.c.b16 %v172, %v168
    %v205 = vpack.c.b16 %v173, %v169
    %v206 = vpack.c.b16 %v174, %v170
    %v207 = vpack.c.b16 %v175, %v171
    %240 = vmatpush.bf16.msra.mxu0 %v204
    %241 = vmatpush.bf16.msra.mxu0 %v200
    %242 = vmatpush.bf16.msra.mxu0 %v196
    %243 = vmatpush.bf16.msra.mxu0 %v192
    %244 = vmatpush.bf16.msra.mxu0 %v188
    %245 = vmatpush.bf16.msra.mxu0 %v184
    %246 = vmatpush.bf16.msra.mxu0 %v180
    %247 = vmatpush.bf16.msra.mxu0 %v176
    %248 = vmatmul.bf16.gmra.mxu0 %v78
    %v249 = vpop.f32.mrf.mxu0
    %v250 = vadd.f32 %v66, %v249
    %v251 = vpop.f32.mrf.mxu0
    %v252 = vadd.f32 %v66, %v251
    %253 = vdwg.mxu0
    %254 = vmatpush.bf16.msra.mxu0 %v205
    %255 = vmatpush.bf16.msra.mxu0 %v201
    %256 = vmatpush.bf16.msra.mxu0 %v197
    %257 = vmatpush.bf16.msra.mxu0 %v193
    %258 = vmatpush.bf16.msra.mxu0 %v189
    %259 = vmatpush.bf16.msra.mxu0 %v185
    %260 = vmatpush.bf16.msra.mxu0 %v181
    %261 = vmatpush.bf16.msra.mxu0 %v177
    %262 = vmatmul.bf16.gmra.mxu0 %v78
    %v263 = vpop.f32.mrf.mxu0
    %v264 = vadd.f32 %v67, %v263
    %v265 = vpop.f32.mrf.mxu0
    %v266 = vadd.f32 %v67, %v265
    %267 = vdwg.mxu0
    %268 = vmatpush.bf16.msra.mxu0 %v206
    %269 = vmatpush.bf16.msra.mxu0 %v202
    %270 = vmatpush.bf16.msra.mxu0 %v198
    %271 = vmatpush.bf16.msra.mxu0 %v194
    %272 = vmatpush.bf16.msra.mxu0 %v190
    %273 = vmatpush.bf16.msra.mxu0 %v186
    %274 = vmatpush.bf16.msra.mxu0 %v182
    %275 = vmatpush.bf16.msra.mxu0 %v178
    %276 = vmatmul.bf16.gmra.mxu0 %v78
    %v277 = vpop.f32.mrf.mxu0
    %v278 = vadd.f32 %v68, %v277
    %v279 = vpop.f32.mrf.mxu0
    %v280 = vadd.f32 %v68, %v279
    %281 = vdwg.mxu0
    %282 = vmatpush.bf16.msra.mxu0 %v207
    %283 = vmatpush.bf16.msra.mxu0 %v203
    %284 = vmatpush.bf16.msra.mxu0 %v199
    %285 = vmatpush.bf16.msra.mxu0 %v195
    %286 = vmatpush.bf16.msra.mxu0 %v191
    %287 = vmatpush.bf16.msra.mxu0 %v187
    %288 = vmatpush.bf16.msra.mxu0 %v183
    %289 = vmatpush.bf16.msra.mxu0 %v179
    %290 = vmatmul.bf16.gmra.mxu0 %v78
    %v291 = vpop.f32.mrf.mxu0
    %v292 = vadd.f32 %v69, %v291
    %v293 = vpop.f32.mrf.mxu0
    %v294 = vadd.f32 %v69, %v293
    %295 = vdwg.mxu0
    %v296 = vmul.f32 %v250, 0.5
    %v297 = vmul.f32 %v264, 0.5
    %v298 = vmul.f32 %v278, 0.5
    %v299 = vmul.f32 %v292, 0.5
    %v300 = vmul.f32 %v252, 0.5
    %v301 = vmul.f32 %v266, 0.5
    %v302 = vmul.f32 %v280, 0.5
    %v303 = vmul.f32 %v294, 0.5
    %v304 = vmul.f32 %v250, 0.044715
    %v305 = vmul.f32 %v264, 0.044715
    %v306 = vmul.f32 %v278, 0.044715
    %v307 = vmul.f32 %v292, 0.044715
    %v308 = vmul.f32 %v252, 0.044715
    %v309 = vmul.f32 %v266, 0.044715
    %v310 = vmul.f32 %v280, 0.044715
    %v311 = vmul.f32 %v294, 0.044715
    %v312 = vmul.f32 %v304, %v250
    %v313 = vmul.f32 %v305, %v264
    %v314 = vmul.f32 %v306, %v278
    %v315 = vmul.f32 %v307, %v292
    %v316 = vmul.f32 %v308, %v252
    %v317 = vmul.f32 %v309, %v266
    %v318 = vmul.f32 %v310, %v280
    %v319 = vmul.f32 %v311, %v294
    %v320 = vmul.f32 %v312, %v250
    %v321 = vmul.f32 %v313, %v264
    %v322 = vmul.f32 %v314, %v278
    %v323 = vmul.f32 %v315, %v292
    %v324 = vmul.f32 %v316, %v252
    %v325 = vmul.f32 %v317, %v266
    %v326 = vmul.f32 %v318, %v280
    %v327 = vmul.f32 %v319, %v294
    %v328 = vadd.f32 %v250, %v320
    %v329 = vadd.f32 %v264, %v321
    %v330 = vadd.f32 %v278, %v322
    %v331 = vadd.f32 %v292, %v323
    %v332 = vadd.f32 %v252, %v324
    %v333 = vadd.f32 %v266, %v325
    %v334 = vadd.f32 %v280, %v326
    %v335 = vadd.f32 %v294, %v327
    %v336 = vmul.f32 %v328, 0.7978846
    %v337 = vmul.f32 %v329, 0.7978846
    %v338 = vmul.f32 %v330, 0.7978846
    %v339 = vmul.f32 %v331, 0.7978846
    %v340 = vmul.f32 %v332, 0.7978846
    %v341 = vmul.f32 %v333, 0.7978846
    %v342 = vmul.f32 %v334, 0.7978846
    %v343 = vmul.f32 %v335, 0.7978846
    %v344 = vtanh.pop %v336
    %v345 = vtanh.pop %v337
    %v346 = vtanh.pop %v338
    %v347 = vtanh.pop %v339
    %v348 = vtanh.pop %v340
    %v349 = vtanh.pop %v341
    %v350 = vtanh.pop %v342
    %v351 = vtanh.pop %v343
    %v352 = vadd.f32 %v344, 1.0
    %v353 = vadd.f32 %v345, 1.0
    %v354 = vadd.f32 %v346, 1.0
    %v355 = vadd.f32 %v347, 1.0
    %v356 = vadd.f32 %v348, 1.0
    %v357 = vadd.f32 %v349, 1.0
    %v358 = vadd.f32 %v350, 1.0
    %v359 = vadd.f32 %v351, 1.0
    %v360 = vmul.f32 %v296, %v352
    %v361 = vmul.f32 %v297, %v353
    %v362 = vmul.f32 %v298, %v354
    %v363 = vmul.f32 %v299, %v355
    %v364 = vmul.f32 %v300, %v356
    %v365 = vmul.f32 %v301, %v357
    %v366 = vmul.f32 %v302, %v358
    %v367 = vmul.f32 %v303, %v359
    %v368 = vpack.c.bf16 %v361, %v360
    %v369 = vpack.c.bf16 %v363, %v362
    %v370 = vpack.c.bf16 %v365, %v364
    %v371 = vpack.c.bf16 %v367, %v366
    %372 = vst [vmem:[%s3] sm:$0xff] %v368
    %373 = vst [vmem:[%s3 + $0x8] sm:$0xff] %v369
    %374 = vst [vmem:[%s3 + $0x10] sm:$0xff] %v370
    %375 = vst [vmem:[%s3 + $0x18] sm:$0xff] %v371
    // Predicated region
    $region18: #{net_forward.13} parent=1 // pred_check
      _
    $region19: #{net_forward.13} parent=1 // pred_check_branch
      %377 = sbr.rel (0) target = $region21
    $region20: #{net_forward.13} parent=1 // pred_region
      _
    $region21: #{net_forward.13} parent=1 // pred_fallthru
      _
    // Predicated region
    $region22: #{net_forward.13} parent=1 // pred_check
      _
    $region23: #{net_forward.13} parent=1 // pred_check_branch
      %379 = sbr.rel (0) target = $region25
    $region24: #{net_forward.13} parent=1 // pred_region
      _
    $region25: #{net_forward.13} parent=1 // pred_fallthru
      _
    %380 = vsyncpa [#allocation3], 1

// kernel: net_forward.19
$region0: #{net_forward.19}
  #allocation0 [shape = 'u32[]', space=smem, size = 0x4, offset = 0x4, fixed_abs, tag = 'smem constant byte address 0x4 - core index']
  #allocation1 [shape = 'u32[72,128]{1,0:T(1,128)}', space=vmem, size = 0x9000, scoped, tag = 'internal scratch']
  %s0 = inlined_call_operand.vmem [shape: bf16[8,128], index: 0, kind: input, shape index: {}]
  %s1 = inlined_call_operand.hbm [shape: bf16[128,128], index: 1, kind: input, shape index: {}]
  %s2 = inlined_call_operand.vmem [shape: f32[1,128], index: 2, kind: input, shape index: {}]
  %s3 = inlined_call_operand.vmem [shape: f32[8,128], index: 3, kind: output, shape index: {}]
  %s4 = sld [smem:[#allocation0]]
  $region26: #{net_forward.19} parent=0
    _
  %s6 = ssub.s32 1, %s4
  %s7 = scalar_select 0, %s6, %s4
  $region1: #{net_forward.19} parent=0
    #allocation2 [shape = 'u8[32768]{0}', space=vmem, size = 0x8000, scoped, tag = 'input window, operand 1, single buffered']
    #allocation3 [shape = 's32[1]{0}', space=sflag, size = 0x4, scoped, tag = 'scoped memory for net_forward.19']
    %8 = vsyncpa [#allocation3], 0
    // Predicated region
    $region2: #{net_forward.19} parent=1 // pred_check
      _
    $region3: #{net_forward.19} parent=1 // pred_check_branch
      %10 = sbr.rel (0) target = $region5
    $region4: #{net_forward.19} parent=1 // pred_region
      _
    $region5: #{net_forward.19} parent=1 // pred_fallthru
      _
    // Predicated region
    $region6: #{net_forward.19} parent=1 // pred_check
      _
    $region7: #{net_forward.19} parent=1 // pred_check_branch
      %12 = sbr.rel (0) target = $region9
    $region8: #{net_forward.19} parent=1 // pred_region
      %14 = vsyncadd [#allocation3], 0
      %s15 = sshll.u32 %s1, 4
      %s16 = int_to_ptr.hbm [resolvable:$true] %s15
      %s17 = sshll.u32 [#allocation2], 4
      %s18 = int_to_ptr.vmem [resolvable:$true] %s17
      %23 = dma.hbm_to_vmem [thread:$0]  %s16, 1024, %s18, [#allocation3], 64, 64, 4
    $region9: #{net_forward.19} parent=1 // pred_fallthru
      _
    // Predicated region
    $region10: #{net_forward.19} parent=1 // pred_check
      _
    $region11: #{net_forward.19} parent=1 // pred_check_branch
      %25 = sbr.rel (0) target = $region13
    $region12: #{net_forward.19} parent=1 // pred_region
      _
    $region13: #{net_forward.19} parent=1 // pred_fallthru
      _
    // Predicated region
    $region14: #{net_forward.19} parent=1 // pred_check
      _
    $region15: #{net_forward.19} parent=1 // pred_check_branch
      %27 = sbr.rel (0) target = $region17
    $region16: #{net_forward.19} parent=1 // pred_region
      %29 = dma.done [#allocation3], 1024
    $region17: #{net_forward.19} parent=1 // pred_fallthru
      _
    %v30 = vld [vmem:[%s0] sm:$0xf]
    %v31 = vld [vmem:[#allocation2] sm:$0xf]
    %v32 = vld [vmem:[#allocation2 + $0x4] sm:$0xf]
    %v33 = vld [vmem:[#allocation2 + $0x8] sm:$0xf]
    %v34 = vld [vmem:[#allocation2 + $0xc] sm:$0xf]
    %v35 = vld [vmem:[#allocation2 + $0x10] sm:$0xf]
    %v36 = vld [vmem:[#allocation2 + $0x14] sm:$0xf]
    %v37 = vld [vmem:[#allocation2 + $0x18] sm:$0xf]
    %v38 = vld [vmem:[#allocation2 + $0x1c] sm:$0xf]
    %v39 = vld [vmem:[#allocation2 + $0x20] sm:$0xf]
    %v40 = vld [vmem:[#allocation2 + $0x24] sm:$0xf]
    %v41 = vld [vmem:[#allocation2 + $0x28] sm:$0xf]
    %v42 = vld [vmem:[#allocation2 + $0x2c] sm:$0xf]
    %v43 = vld [vmem:[#allocation2 + $0x30] sm:$0xf]
    %v44 = vld [vmem:[#allocation2 + $0x34] sm:$0xf]
    %v45 = vld [vmem:[#allocation2 + $0x38] sm:$0xf]
    %v46 = vld [vmem:[#allocation2 + $0x3c] sm:$0xf]
    %v47 = vld [vmem:[%s2] sm:$0x1]
    %v49 = vperm.slane %v47, 0
    %v67 = vunpack.c.l.b16 %v31
    %v68 = vunpack.c.l.b16 %v32
    %v69 = vunpack.c.l.b16 %v33
    %v70 = vunpack.c.l.b16 %v34
    %v71 = vunpack.c.l.b16 %v35
    %v72 = vunpack.c.l.b16 %v36
    %v73 = vunpack.c.l.b16 %v37
    %v74 = vunpack.c.l.b16 %v38
    %v75 = vunpack.c.l.b16 %v39
    %v76 = vunpack.c.l.b16 %v40
    %v77 = vunpack.c.l.b16 %v41
    %v78 = vunpack.c.l.b16 %v42
    %v79 = vunpack.c.l.b16 %v43
    %v80 = vunpack.c.l.b16 %v44
    %v81 = vunpack.c.l.b16 %v45
    %v82 = vunpack.c.l.b16 %v46
    %v83 = vpack.c.b16 %v68, %v67
    %v84 = vpack.c.b16 %v70, %v69
    %v85 = vpack.c.b16 %v72, %v71
    %v86 = vpack.c.b16 %v74, %v73
    %v87 = vpack.c.b16 %v76, %v75
    %v88 = vpack.c.b16 %v78, %v77
    %v89 = vpack.c.b16 %v80, %v79
    %v90 = vpack.c.b16 %v82, %v81
    %99 = vmatpush.bf16.msra.mxu0 %v90
    %100 = vmatpush.bf16.msra.mxu0 %v89
    %101 = vmatpush.bf16.msra.mxu0 %v88
    %102 = vmatpush.bf16.msra.mxu0 %v87
    %103 = vmatpush.bf16.msra.mxu0 %v86
    %104 = vmatpush.bf16.msra.mxu0 %v85
    %105 = vmatpush.bf16.msra.mxu0 %v84
    %106 = vmatpush.bf16.msra.mxu0 %v83
    %107 = vmatmul.bf16.gmra.mxu0 %v30
    %v108 = vpop.f32.mrf.mxu0
    %v109 = vadd.f32 %v49, %v108
    %v110 = vpop.f32.mrf.mxu0
    %111 = vdwg.mxu0
    %112 = vst [vmem:[%s3] sm:$0xff] %v109
    // Predicated region
    $region18: #{net_forward.19} parent=1 // pred_check
      _
    $region19: #{net_forward.19} parent=1 // pred_check_branch
      %114 = sbr.rel (0) target = $region21
    $region20: #{net_forward.19} parent=1 // pred_region
      _
    $region21: #{net_forward.19} parent=1 // pred_fallthru
      _
    // Predicated region
    $region22: #{net_forward.19} parent=1 // pred_check
      _
    $region23: #{net_forward.19} parent=1 // pred_check_branch
      %116 = sbr.rel (0) target = $region25
    $region24: #{net_forward.19} parent=1 // pred_region
      _
    $region25: #{net_forward.19} parent=1 // pred_fallthru
      _
    %117 = vsyncpa [#allocation3], 1

// kernel: net_forward.14
$region0: #{net_forward.14}
  #allocation0 [shape = 'u32[]', space=smem, size = 0x4, offset = 0x4, fixed_abs, tag = 'smem constant byte address 0x4 - core index']
  #allocation1 [shape = 'u32[72,128]{1,0:T(1,128)}', space=vmem, size = 0x9000, scoped, tag = 'internal scratch']
  %s0 = inlined_call_operand.vmem [shape: bf16[16,512], index: 0, kind: input, shape index: {}]
  %s1 = inlined_call_operand.hbm [shape: bf16[512,128], index: 1, kind: input, shape index: {}]
  %s2 = inlined_call_operand.vmem [shape: f32[1,128], index: 2, kind: input, shape index: {}]
  %s3 = inlined_call_operand.vmem [shape: bf16[16,128], index: 3, kind: input, shape index: {}]
  %s4 = inlined_call_operand.vmem [shape: f32[1,128], index: 4, kind: input, shape index: {}]
  %s5 = inlined_call_operand.vmem [shape: f32[1,128], index: 5, kind: input, shape index: {}]
  %s6 = inlined_call_operand.vmem [shape: bf16[16,128], index: 6, kind: output, shape index: {}]
  %s7 = sld [smem:[#allocation0]]
  $region38: #{net_forward.14} parent=0
    _
  %s9 = ssub.s32 1, %s7
  %s10 = scalar_select 0, %s9, %s7
  $region1: #{net_forward.14} parent=0
    #allocation2 [shape = 'u8[131072]{0}', space=vmem, size = 0x20000, scoped, tag = 'input window, operand 1, single buffered']
    #allocation3 [shape = 's32[1]{0}', space=sflag, size = 0x4, scoped, tag = 'scoped memory for net_forward.14']
    %11 = vsyncpa [#allocation3], 0
    // Predicated region
    $region2: #{net_forward.14} parent=1 // pred_check
      _
    $region3: #{net_forward.14} parent=1 // pred_check_branch
      %13 = sbr.rel (0) target = $region5
    $region4: #{net_forward.14} parent=1 // pred_region
      _
    $region5: #{net_forward.14} parent=1 // pred_fallthru
      _
    // Predicated region
    $region6: #{net_forward.14} parent=1 // pred_check
      _
    $region7: #{net_forward.14} parent=1 // pred_check_branch
      %15 = sbr.rel (0) target = $region9
    $region8: #{net_forward.14} parent=1 // pred_region
      %17 = vsyncadd [#allocation3], 0
      %s18 = sshll.u32 %s1, 4
      %s19 = int_to_ptr.hbm [resolvable:$true] %s18
      %s20 = sshll.u32 [#allocation2], 4
      %s21 = int_to_ptr.vmem [resolvable:$true] %s20
      %26 = dma.hbm_to_vmem [thread:$0]  %s19, 4096, %s21, [#allocation3], 64, 64, 4
    $region9: #{net_forward.14} parent=1 // pred_fallthru
      _
    // Predicated region
    $region10: #{net_forward.14} parent=1 // pred_check
      _
    $region11: #{net_forward.14} parent=1 // pred_check_branch
      %28 = sbr.rel (0) target = $region13
    $region12: #{net_forward.14} parent=1 // pred_region
      _
    $region13: #{net_forward.14} parent=1 // pred_fallthru
      _
    // Predicated region
    $region14: #{net_forward.14} parent=1 // pred_check
      _
    $region15: #{net_forward.14} parent=1 // pred_check_branch
      %30 = sbr.rel (0) target = $region17
    $region16: #{net_forward.14} parent=1 // pred_region
      _
    $region17: #{net_forward.14} parent=1 // pred_fallthru
      _
    // Predicated region
    $region18: #{net_forward.14} parent=1 // pred_check
      _
    $region19: #{net_forward.14} parent=1 // pred_check_branch
      %32 = sbr.rel (0) target = $region21
    $region20: #{net_forward.14} parent=1 // pred_region
      _
    $region21: #{net_forward.14} parent=1 // pred_fallthru
      _
    // Predicated region
    $region22: #{net_forward.14} parent=1 // pred_check
      _
    $region23: #{net_forward.14} parent=1 // pred_check_branch
      %34 = sbr.rel (0) target = $region25
    $region24: #{net_forward.14} parent=1 // pred_region
      _
    $region25: #{net_forward.14} parent=1 // pred_fallthru
      _
    // Predicated region
    $region26: #{net_forward.14} parent=1 // pred_check
      _
    $region27: #{net_forward.14} parent=1 // pred_check_branch
      %36 = sbr.rel (0) target = $region29
    $region28: #{net_forward.14} parent=1 // pred_region
      %38 = dma.done [#allocation3], 4096
    $region29: #{net_forward.14} parent=1 // pred_fallthru
      _
    %v39 = vld [vmem:[%s0] sm:$0xff]
    %v40 = vld [vmem:[%s0 + $0x8] sm:$0xff]
    %v41 = vld [vmem:[%s0 + $0x10] sm:$0xff]
    %v42 = vld [vmem:[%s0 + $0x18] sm:$0xff]
    %v43 = vld [vmem:[#allocation2] sm:$0xf]
    %v44 = vld [vmem:[#allocation2 + $0x4] sm:$0xf]
    %v45 = vld [vmem:[#allocation2 + $0x8] sm:$0xf]
    %v46 = vld [vmem:[#allocation2 + $0xc] sm:$0xf]
    %v47 = vld [vmem:[#allocation2 + $0x10] sm:$0xf]
    %v48 = vld [vmem:[#allocation2 + $0x14] sm:$0xf]
    %v49 = vld [vmem:[#allocation2 + $0x18] sm:$0xf]
    %v50 = vld [vmem:[#allocation2 + $0x1c] sm:$0xf]
    %v51 = vld [vmem:[#allocation2 + $0x20] sm:$0xf]
    %v52 = vld [vmem:[#allocation2 + $0x24] sm:$0xf]
    %v53 = vld [vmem:[#allocation2 + $0x28] sm:$0xf]
    %v54 = vld [vmem:[#allocation2 + $0x2c] sm:$0xf]
    %v55 = vld [vmem:[#allocation2 + $0x30] sm:$0xf]
    %v56 = vld [vmem:[#allocation2 + $0x34] sm:$0xf]
    %v57 = vld [vmem:[#allocation2 + $0x38] sm:$0xf]
    %v58 = vld [vmem:[#allocation2 + $0x3c] sm:$0xf]
    %v59 = vld [vmem:[#allocation2 + $0x40] sm:$0xf]
    %v60 = vld [vmem:[#allocation2 + $0x44] sm:$0xf]
    %v61 = vld [vmem:[#allocation2 + $0x48] sm:$0xf]
    %v62 = vld [vmem:[#allocation2 + $0x4c] sm:$0xf]
    %v63 = vld [vmem:[#allocation2 + $0x50] sm:$0xf]
    %v64 = vld [vmem:[#allocation2 + $0x54] sm:$0xf]
    %v65 = vld [vmem:[#allocation2 + $0x58] sm:$0xf]
    %v66 = vld [vmem:[#allocation2 + $0x5c] sm:$0xf]
    %v67 = vld [vmem:[#allocation2 + $0x60] sm:$0xf]
    %v68 = vld [vmem:[#allocation2 + $0x64] sm:$0xf]
    %v69 = vld [vmem:[#allocation2 + $0x68] sm:$0xf]
    %v70 = vld [vmem:[#allocation2 + $0x6c] sm:$0xf]
    %v71 = vld [vmem:[#allocation2 + $0x70] sm:$0xf]
    %v72 = vld [vmem:[#allocation2 + $0x74] sm:$0xf]
    %v73 = vld [vmem:[#allocation2 + $0x78] sm:$0xf]
    %v74 = vld [vmem:[#allocation2 + $0x7c] sm:$0xf]
    %v75 = vld [vmem:[#allocation2 + $0x80] sm:$0xf]
    %v76 = vld [vmem:[#allocation2 + $0x84] sm:$0xf]
    %v77 = vld [vmem:[#allocation2 + $0x88] sm:$0xf]
    %v78 = vld [vmem:[#allocation2 + $0x8c] sm:$0xf]
    %v79 = vld [vmem:[#allocation2 + $0x90] sm:$0xf]
    %v80 = vld [vmem:[#allocation2 + $0x94] sm:$0xf]
    %v81 = vld [vmem:[#allocation2 + $0x98] sm:$0xf]
    %v82 = vld [vmem:[#allocation2 + $0x9c] sm:$0xf]
    %v83 = vld [vmem:[#allocation2 + $0xa0] sm:$0xf]
    %v84 = vld [vmem:[#allocation2 + $0xa4] sm:$0xf]
    %v85 = vld [vmem:[#allocation2 + $0xa8] sm:$0xf]
    %v86 = vld [vmem:[#allocation2 + $0xac] sm:$0xf]
    %v87 = vld [vmem:[#allocation2 + $0xb0] sm:$0xf]
    %v88 = vld [vmem:[#allocation2 + $0xb4] sm:$0xf]
    %v89 = vld [vmem:[#allocation2 + $0xb8] sm:$0xf]
    %v90 = vld [vmem:[#allocation2 + $0xbc] sm:$0xf]
    %v91 = vld [vmem:[#allocation2 + $0xc0] sm:$0xf]
    %v92 = vld [vmem:[#allocation2 + $0xc4] sm:$0xf]
    %v93 = vld [vmem:[#allocation2 + $0xc8] sm:$0xf]
    %v94 = vld [vmem:[#allocation2 + $0xcc] sm:$0xf]
    %v95 = vld [vmem:[#allocation2 + $0xd0] sm:$0xf]
    %v96 = vld [vmem:[#allocation2 + $0xd4] sm:$0xf]
    %v97 = vld [vmem:[#allocation2 + $0xd8] sm:$0xf]
    %v98 = vld [vmem:[#allocation2 + $0xdc] sm:$0xf]
    %v99 = vld [vmem:[#allocation2 + $0xe0] sm:$0xf]
    %v100 = vld [vmem:[#allocation2 + $0xe4] sm:$0xf]
    %v101 = vld [vmem:[#allocation2 + $0xe8] sm:$0xf]
    %v102 = vld [vmem:[#allocation2 + $0xec] sm:$0xf]
    %v103 = vld [vmem:[#allocation2 + $0xf0] sm:$0xf]
    %v104 = vld [vmem:[#allocation2 + $0xf4] sm:$0xf]
    %v105 = vld [vmem:[#allocation2 + $0xf8] sm:$0xf]
    %v106 = vld [vmem:[#allocation2 + $0xfc] sm:$0xf]
    %v107 = vld [vmem:[%s2] sm:$0x1]
    %v109 = vperm.slane %v107, 0
    %v115 = vunpack.c.l.b16 %v39
    %v116 = vunpack.c.h.b16 %v39
    %v117 = vunpack.c.l.b16 %v40
    %v118 = vunpack.c.h.b16 %v40
    %v119 = vunpack.c.l.b16 %v41
    %v120 = vunpack.c.h.b16 %v41
    %v121 = vunpack.c.l.b16 %v42
    %v122 = vunpack.c.h.b16 %v42
    %v123 = vpack.c.b16 %v119, %v115
    %v124 = vpack.c.b16 %v120, %v116
    %v125 = vpack.c.b16 %v121, %v117
    %v126 = vpack.c.b16 %v122, %v118
    %v195 = vunpack.c.l.b16 %v43
    %v196 = vunpack.c.l.b16 %v44
    %v197 = vunpack.c.l.b16 %v45
    %v198 = vunpack.c.l.b16 %v46
    %v199 = vunpack.c.l.b16 %v47
    %v200 = vunpack.c.l.b16 %v48
    %v201 = vunpack.c.l.b16 %v49
    %v202 = vunpack.c.l.b16 %v50
    %v203 = vunpack.c.l.b16 %v51
    %v204 = vunpack.c.l.b16 %v52
    %v205 = vunpack.c.l.b16 %v53
    %v206 = vunpack.c.l.b16 %v54
    %v207 = vunpack.c.l.b16 %v55
    %v208 = vunpack.c.l.b16 %v56
    %v209 = vunpack.c.l.b16 %v57
    %v210 = vunpack.c.l.b16 %v58
    %v211 = vunpack.c.l.b16 %v59
    %v212 = vunpack.c.l.b16 %v60
    %v213 = vunpack.c.l.b16 %v61
    %v214 = vunpack.c.l.b16 %v62
    %v215 = vunpack.c.l.b16 %v63
    %v216 = vunpack.c.l.b16 %v64
    %v217 = vunpack.c.l.b16 %v65
    %v218 = vunpack.c.l.b16 %v66
    %v219 = vunpack.c.l.b16 %v67
    %v220 = vunpack.c.l.b16 %v68
    %v221 = vunpack.c.l.b16 %v69
    %v222 = vunpack.c.l.b16 %v70
    %v223 = vunpack.c.l.b16 %v71
    %v224 = vunpack.c.l.b16 %v72
    %v225 = vunpack.c.l.b16 %v73
    %v226 = vunpack.c.l.b16 %v74
    %v227 = vunpack.c.l.b16 %v75
    %v228 = vunpack.c.l.b16 %v76
    %v229 = vunpack.c.l.b16 %v77
    %v230 = vunpack.c.l.b16 %v78
    %v231 = vunpack.c.l.b16 %v79
    %v232 = vunpack.c.l.b16 %v80
    %v233 = vunpack.c.l.b16 %v81
    %v234 = vunpack.c.l.b16 %v82
    %v235 = vunpack.c.l.b16 %v83
    %v236 = vunpack.c.l.b16 %v84
    %v237 = vunpack.c.l.b16 %v85
    %v238 = vunpack.c.l.b16 %v86
    %v239 = vunpack.c.l.b16 %v87
    %v240 = vunpack.c.l.b16 %v88
    %v241 = vunpack.c.l.b16 %v89
    %v242 = vunpack.c.l.b16 %v90
    %v243 = vunpack.c.l.b16 %v91
    %v244 = vunpack.c.l.b16 %v92
    %v245 = vunpack.c.l.b16 %v93
    %v246 = vunpack.c.l.b16 %v94
    %v247 = vunpack.c.l.b16 %v95
    %v248 = vunpack.c.l.b16 %v96
    %v249 = vunpack.c.l.b16 %v97
    %v250 = vunpack.c.l.b16 %v98
    %v251 = vunpack.c.l.b16 %v99
    %v252 = vunpack.c.l.b16 %v100
    %v253 = vunpack.c.l.b16 %v101
    %v254 = vunpack.c.l.b16 %v102
    %v255 = vunpack.c.l.b16 %v103
    %v256 = vunpack.c.l.b16 %v104
    %v257 = vunpack.c.l.b16 %v105
    %v258 = vunpack.c.l.b16 %v106
    %v259 = vpack.c.b16 %v196, %v195
    %v260 = vpack.c.b16 %v198, %v197
    %v261 = vpack.c.b16 %v200, %v199
    %v262 = vpack.c.b16 %v202, %v201
    %v263 = vpack.c.b16 %v204, %v203
    %v264 = vpack.c.b16 %v206, %v205
    %v265 = vpack.c.b16 %v208, %v207
    %v266 = vpack.c.b16 %v210, %v209
    %v267 = vpack.c.b16 %v212, %v211
    %v268 = vpack.c.b16 %v214, %v213
    %v269 = vpack.c.b16 %v216, %v215
    %v270 = vpack.c.b16 %v218, %v217
    %v271 = vpack.c.b16 %v220, %v219
    %v272 = vpack.c.b16 %v222, %v221
    %v273 = vpack.c.b16 %v224, %v223
    %v274 = vpack.c.b16 %v226, %v225
    %v275 = vpack.c.b16 %v228, %v227
    %v276 = vpack.c.b16 %v230, %v229
    %v277 = vpack.c.b16 %v232, %v231
    %v278 = vpack.c.b16 %v234, %v233
    %v279 = vpack.c.b16 %v236, %v235
    %v280 = vpack.c.b16 %v238, %v237
    %v281 = vpack.c.b16 %v240, %v239
    %v282 = vpack.c.b16 %v242, %v241
    %v283 = vpack.c.b16 %v244, %v243
    %v284 = vpack.c.b16 %v246, %v245
    %v285 = vpack.c.b16 %v248, %v247
    %v286 = vpack.c.b16 %v250, %v249
    %v287 = vpack.c.b16 %v252, %v251
    %v288 = vpack.c.b16 %v254, %v253
    %v289 = vpack.c.b16 %v256, %v255
    %v290 = vpack.c.b16 %v258, %v257
    %323 = vmatpush.bf16.msra.mxu0 %v266
    %324 = vmatpush.bf16.msra.mxu0 %v265
    %325 = vmatpush.bf16.msra.mxu0 %v264
    %326 = vmatpush.bf16.msra.mxu0 %v263
    %327 = vmatpush.bf16.msra.mxu0 %v262
    %328 = vmatpush.bf16.msra.mxu0 %v261
    %329 = vmatpush.bf16.msra.mxu0 %v260
    %330 = vmatpush.bf16.msra.mxu0 %v259
    %331 = vmatmul.bf16.gmra.mxu0 %v123
    %v332 = vpop.f32.mrf.mxu0
    %v333 = vadd.f32 %v109, %v332
    %v334 = vpop.f32.mrf.mxu0
    %v335 = vadd.f32 %v109, %v334
    %336 = vdwg.mxu0
    %337 = vmatpush.bf16.msra.mxu0 %v274
    %338 = vmatpush.bf16.msra.mxu0 %v273
    %339 = vmatpush.bf16.msra.mxu0 %v272
    %340 = vmatpush.bf16.msra.mxu0 %v271
    %341 = vmatpush.bf16.msra.mxu0 %v270
    %342 = vmatpush.bf16.msra.mxu0 %v269
    %343 = vmatpush.bf16.msra.mxu0 %v268
    %344 = vmatpush.bf16.msra.mxu0 %v267
    %345 = vmatmul.bf16.gmra.mxu0 %v124
    %v346 = vpop.f32.mrf.mxu0
    %v347 = vadd.f32 %v333, %v346
    %v348 = vpop.f32.mrf.mxu0
    %v349 = vadd.f32 %v335, %v348
    %350 = vdwg.mxu0
    %351 = vmatpush.bf16.msra.mxu0 %v282
    %352 = vmatpush.bf16.msra.mxu0 %v281
    %353 = vmatpush.bf16.msra.mxu0 %v280
    %354 = vmatpush.bf16.msra.mxu0 %v279
    %355 = vmatpush.bf16.msra.mxu0 %v278
    %356 = vmatpush.bf16.msra.mxu0 %v277
    %357 = vmatpush.bf16.msra.mxu0 %v276
    %358 = vmatpush.bf16.msra.mxu0 %v275
    %359 = vmatmul.bf16.gmra.mxu0 %v125
    %v360 = vpop.f32.mrf.mxu0
    %v361 = vadd.f32 %v347, %v360
    %v362 = vpop.f32.mrf.mxu0
    %v363 = vadd.f32 %v349, %v362
    %364 = vdwg.mxu0
    %365 = vmatpush.bf16.msra.mxu0 %v290
    %366 = vmatpush.bf16.msra.mxu0 %v289
    %367 = vmatpush.bf16.msra.mxu0 %v288
    %368 = vmatpush.bf16.msra.mxu0 %v287
    %369 = vmatpush.bf16.msra.mxu0 %v286
    %370 = vmatpush.bf16.msra.mxu0 %v285
    %371 = vmatpush.bf16.msra.mxu0 %v284
    %372 = vmatpush.bf16.msra.mxu0 %v283
    %373 = vmatmul.bf16.gmra.mxu0 %v126
    %v374 = vpop.f32.mrf.mxu0
    %v375 = vadd.f32 %v361, %v374
    %v376 = vpop.f32.mrf.mxu0
    %v377 = vadd.f32 %v363, %v376
    %378 = vdwg.mxu0
    %v379 = vld [vmem:[%s3] sm:$0xf]
    %v380 = vld [vmem:[%s3 + $0x4] sm:$0xf]
    %v381 = vunpack.c.l.bf16 %v379
    %v382 = vunpack.c.l.bf16 %v380
    %v383 = vadd.f32 %v375, %v381
    %v384 = vadd.f32 %v377, %v382
    %385 = vadd.xlane.f32.xlu0 %v383
    %v386 = vpop.xlane.xlu0 %385
    %387 = vadd.xlane.f32.xlu0 %v384
    %v388 = vpop.xlane.xlu0 %387
    %v389 = vrcp.pop 128.0
    %v390 = vmul.f32 128.0, %v389
    %v391 = vsub.f32 1.0, %v390
    %v392 = vmul.f32 %v389, %v391
    %v393 = vadd.f32 %v389, %v392
    %vm394 = vweird.f32 %v389
    %v395 = vsel %vm394, %v389, %v393
    %v396 = vmul.f32 %v386, %v395
    %v397 = vmul.f32 %v388, %v395
    %v398 = vsub.f32 %v383, %v396
    %v399 = vsub.f32 %v384, %v397
    %v400 = vmul.f32 %v398, %v398
    %v401 = vmul.f32 %v399, %v399
    %402 = vadd.xlane.f32.xlu0 %v400
    %v403 = vpop.xlane.xlu0 %402
    %404 = vadd.xlane.f32.xlu0 %v401
    %v405 = vpop.xlane.xlu0 %404
    %v406 = vmul.f32 %v403, %v395
    %v407 = vmul.f32 %v405, %v395
    %v408 = vadd.f32 %v406, 1e-12
    %v409 = vadd.f32 %v407, 1e-12
    %v410 = vrsqrt.pop %v408
    %v411 = vmul.f32 %v410, %v408
    %v412 = vmul.f32 %v411, %v410
    %v413 = vmul.f32 0.5, %v412
    %v414 = vsub.f32 1.5, %v413
    %v415 = vmul.f32 %v410, %v414
    %vm416 = vweird.f32 %v408
    %vm417 = vweird.f32 %v410
    %vm418 = vmor %vm416, %vm417
    %v419 = vsel %vm418, %v410, %v415
    %v420 = vrsqrt.pop %v409
    %v421 = vmul.f32 %v420, %v409
    %v422 = vmul.f32 %v421, %v420
    %v423 = vmul.f32 0.5, %v422
    %v424 = vsub.f32 1.5, %v423
    %v425 = vmul.f32 %v420, %v424
    %vm426 = vweird.f32 %v409
    %vm427 = vweird.f32 %v420
    %vm428 = vmor %vm426, %vm427
    %v429 = vsel %vm428, %v420, %v425
    %v430 = vmul.f32 %v398, %v419
    %v431 = vmul.f32 %v399, %v429
    %v432 = vld [vmem:[%s4] sm:$0x1]
    %v434 = vperm.slane %v432, 0
    %v436 = vmul.f32 %v430, %v434
    %v437 = vmul.f32 %v431, %v434
    %v438 = vld [vmem:[%s5] sm:$0x1]
    %v440 = vperm.slane %v438, 0
    %v442 = vadd.f32 %v436, %v440
    %v443 = vadd.f32 %v437, %v440
    %v444 = vpack.c.bf16 %v442, %v442
    %v445 = vpack.c.bf16 %v443, %v443
    %446 = vst [vmem:[%s6] sm:$0xf] %v444
    %447 = vst [vmem:[%s6 + $0x4] sm:$0xf] %v445
    // Predicated region
    $region30: #{net_forward.14} parent=1 // pred_check
      _
    $region31: #{net_forward.14} parent=1 // pred_check_branch
      %449 = sbr.rel (0) target = $region33
    $region32: #{net_forward.14} parent=1 // pred_region
      _
    $region33: #{net_forward.14} parent=1 // pred_fallthru
      _
    // Predicated region
    $region34: #{net_forward.14} parent=1 // pred_check
      _
    $region35: #{net_forward.14} parent=1 // pred_check_branch
      %451 = sbr.rel (0) target = $region37
    $region36: #{net_forward.14} parent=1 // pred_region
      _
    $region37: #{net_forward.14} parent=1 // pred_fallthru
      _
    %452 = vsyncpa [#allocation3], 1

</llo_original>
